<compile_context>
chip_gen: v7x
topology: tpu7x:2x2x1
jax: 0.10.0
libtpu: 0.0.40
codegen_flags: <defaults>
</compile_context>

<pallas_src>
import functools
import math

import jax
import jax.numpy as jnp
from jax.experimental import pallas as pl
from jax.experimental.pallas import tpu as pltpu


# ---------------------------------------------------------------------------
# Pallas kernel: cross attention + residual average, channel-major (C, N)
# ---------------------------------------------------------------------------
def _cross_attn_kernel(x1_ref, x2_ref,
                       wq_ref, bq_ref,
                       wk_ref, bk_ref,
                       wv_ref, bv_ref,
                       wp_ref, bp_ref,
                       out_ref, *, bb, scale):
    n = x1_ref.shape[2]                       # tokens per batch item (H*W)

    wq = wq_ref[...]; wk = wk_ref[...]; wv = wv_ref[...]; wp = wp_ref[...]
    bq = bq_ref[...]; bk = bk_ref[...]; bv = bv_ref[...]; bp = bp_ref[...]

    # (N, N) identity, used to transpose Q on the MXU via an A @ B^T matmul
    # (avoids an XLU relayout / transposed-LHS contraction).  Hoisted out of
    # the per-batch loop.
    rows = jax.lax.broadcasted_iota(jnp.int32, (n, n), 0)
    cols = jax.lax.broadcasted_iota(jnp.int32, (n, n), 1)
    eye = (rows == cols).astype(jnp.float32)

    tb = (((1,), (1,)), ((), ()))             # contract minor dims: A @ B^T

    # bb is a small static constant (1 or B on this problem) -> fully unrolled.
    for b in range(bb):
        x1 = x1_ref[b]                        # (C, N) keys / residual
        x2 = x2_ref[b]                        # (C, N) queries / values

        # Linear projections in channel-major form: y^T = W @ x^T + b.
        q_t = jnp.dot(wq, x2, preferred_element_type=jnp.float32) + bq   # (C, N)
        k_t = jnp.dot(wk, x1, preferred_element_type=jnp.float32) + bk   # (C, N)
        v_t = jnp.dot(wv, x2, preferred_element_type=jnp.float32) + bv   # (C, N)

        # Token-major queries via MXU transpose (eye @ q_t^T); fold 1/sqrt(C)
        # into Q here instead of scaling the (N, N) score matrix.
        q = jax.lax.dot_general(eye, q_t, tb,
                                preferred_element_type=jnp.float32) * scale  # (N, C)

        # Scaled dot-product attention, softmax over keys (last axis).
        s = jnp.dot(q, k_t, preferred_element_type=jnp.float32)          # (N, N)
        s = s - jnp.max(s, axis=-1, keepdims=True)
        p = jnp.exp(s)
        p = p * pl.reciprocal(jnp.sum(p, axis=-1, keepdims=True), approx=True)

        # o^T = v^T @ p^T (A @ B^T form), then output projection.
        o_t = jax.lax.dot_general(v_t, p, tb,
                                  preferred_element_type=jnp.float32)    # (C, N)
        y_t = jnp.dot(wp, o_t, preferred_element_type=jnp.float32) + bp  # (C, N)

        # directupdate: (x1 + x21) / 2, already in NCHW memory order.
        out_ref[b] = ((x1 + y_t) * 0.5).astype(out_ref.dtype)


def _num_batch_chunks(batch):
    """1 grid step on single-TC chips (v5e/v6e); 2 parallel steps on 2-TC chips."""
    try:
        kind = jax.devices()[0].device_kind.lower()
    except Exception:
        kind = ""
    two_core = any(tag in kind for tag in ("v7", "7x", "v4"))
    if two_core and batch % 2 == 0:
        return 2
    return 1


def directupdate_crosattn_pallas(x1_nchw, x2_nchw, params):
    """x1_nchw, x2_nchw: (B, C, H, W) float32.  Weights in PyTorch (out, in)
    convention, biases (C,).  Returns (B, C, H, W)."""
    B, C, H, W = x1_nchw.shape
    N = H * W

    # Free reshapes only -- no transposes around the kernel.
    x1 = x1_nchw.reshape(B, C, N)
    x2 = x2_nchw.reshape(B, C, N)

    wq, bq, wk, bk, wv, bv, wp, bp = params
    bq = bq.reshape(C, 1)
    bk = bk.reshape(C, 1)
    bv = bv.reshape(C, 1)
    bp = bp.reshape(C, 1)

    chunks = _num_batch_chunks(B)
    bb = B // chunks

    tok_spec = pl.BlockSpec((bb, C, N), lambda i: (i, 0, 0))
    w_spec = pl.BlockSpec((C, C), lambda i: (0, 0))
    b_spec = pl.BlockSpec((C, 1), lambda i: (0, 0))

    kernel = functools.partial(_cross_attn_kernel, bb=bb, scale=1.0 / math.sqrt(C))

    out = pl.pallas_call(
        kernel,
        out_shape=jax.ShapeDtypeStruct((B, C, N), jnp.float32),
        grid_spec=pltpu.PrefetchScalarGridSpec(
            num_scalar_prefetch=0,
            grid=(chunks,),
            in_specs=[tok_spec, tok_spec,
                      w_spec, b_spec,
                      w_spec, b_spec,
                      w_spec, b_spec,
                      w_spec, b_spec],
            out_specs=tok_spec,
        ),
        compiler_params=pltpu.CompilerParams(
            dimension_semantics=("parallel",)),
    )(x1, x2, wq, bq, wk, bk, wv, bv, wp, bp)

    return out.reshape(B, C, H, W)


# ---------------------------------------------------------------------------
# Pure-JAX reference (same math, PyTorch nn.Linear (out, in) weights)
# ---------------------------------------------------------------------------
def _reference(x1_nchw, x2_nchw, params):
    B, C, H, W = x1_nchw.shape
    N = H * W
    wq, bq, wk, bk, wv, bv, wp, bp = params
    t1 = jnp.transpose(x1_nchw.reshape(B, C, N), (0, 2, 1))
    t2 = jnp.transpose(x2_nchw.reshape(B, C, N), (0, 2, 1))
    q = t2 @ wq.T + bq
    k = t1 @ wk.T + bk
    v = t2 @ wv.T + bv
    s = jnp.einsum("bqc,bkc->bqk", q, k) / math.sqrt(C)
    p = jax.nn.softmax(s, axis=-1)
    o = jnp.einsum("bqk,bkc->bqc", p, v) @ wp.T + bp
    out_tok = (t1 + o) * 0.5
    return jnp.transpose(out_tok, (0, 2, 1)).reshape(B, C, H, W)


if __name__ == "__main__":
    # Small shapes consistent with the module: dim = C = 32, spatial 8x8, batch 2.
    B, C, H, W = 2, 32, 8, 8

    key = jax.random.PRNGKey(0)
    keys = jax.random.split(key, 10)
    x1 = jax.random.normal(keys[0], (B, C, H, W), dtype=jnp.float32)
    x2 = jax.random.normal(keys[1], (B, C, H, W), dtype=jnp.float32)

    # Synthetic nn.Linear(dim, dim) params, PyTorch (out, in) convention.
    def init_linear(kw, kb):
        bound = 1.0 / math.sqrt(C)
        w = jax.random.uniform(kw, (C, C), jnp.float32, -bound, bound)
        b = jax.random.uniform(kb, (C,), jnp.float32, -bound, bound)
        return w, b

    wq, bq = init_linear(keys[2], keys[3])
    wk, bk = init_linear(keys[4], keys[5])
    wv, bv = init_linear(keys[6], keys[7])
    wp, bp = init_linear(keys[8], keys[9])
    params = (wq, bq, wk, bk, wv, bv, wp, bp)

    out = directupdate_crosattn_pallas(x1, x2, params)
    out = jax.block_until_ready(out)

    ref = _reference(x1, x2, params)
    assert out.shape == (B, C, H, W)
    # Tolerance leaves room for the approximate (EUP) reciprocal in softmax.
    assert jnp.allclose(out, ref, atol=1e-2, rtol=1e-2), float(
        jnp.max(jnp.abs(out - ref)))

    print("KERNEL_OK")
</pallas_src>

<mosaic_0001>
module attributes {stable_mosaic.version = 11 : i64} {
  func.func @_cross_attn_kernel(%arg0: i32, %arg1: memref<2x32x64xf32, #tpu.memory_space<vmem>>, %arg2: memref<2x32x64xf32, #tpu.memory_space<vmem>>, %arg3: memref<32x32xf32, #tpu.memory_space<vmem>>, %arg4: memref<32x1xf32, #tpu.memory_space<vmem>>, %arg5: memref<32x32xf32, #tpu.memory_space<vmem>>, %arg6: memref<32x1xf32, #tpu.memory_space<vmem>>, %arg7: memref<32x32xf32, #tpu.memory_space<vmem>>, %arg8: memref<32x1xf32, #tpu.memory_space<vmem>>, %arg9: memref<32x32xf32, #tpu.memory_space<vmem>>, %arg10: memref<32x1xf32, #tpu.memory_space<vmem>>, %arg11: memref<2x32x64xf32, #tpu.memory_space<vmem>>) attributes {dimension_semantics = [#tpu.dimension_semantics<parallel>], iteration_bounds = array<i64: 1>, scalar_prefetch = 0 : i64, scratch_operands = 0 : i64, tpu.core_type = #tpu.core_type<tc>, window_params = [{transform_indices = @transform_0, window_bounds = array<i64: 2, 32, 64>}, {transform_indices = @transform_1, window_bounds = array<i64: 2, 32, 64>}, {pipeline_mode = #tpu.pipeline_mode<synchronous>, transform_indices = @transform_2, window_bounds = array<i64: 32, 32>}, {pipeline_mode = #tpu.pipeline_mode<synchronous>, transform_indices = @transform_3, window_bounds = array<i64: 32, 1>}, {pipeline_mode = #tpu.pipeline_mode<synchronous>, transform_indices = @transform_4, window_bounds = array<i64: 32, 32>}, {pipeline_mode = #tpu.pipeline_mode<synchronous>, transform_indices = @transform_5, window_bounds = array<i64: 32, 1>}, {pipeline_mode = #tpu.pipeline_mode<synchronous>, transform_indices = @transform_6, window_bounds = array<i64: 32, 32>}, {pipeline_mode = #tpu.pipeline_mode<synchronous>, transform_indices = @transform_7, window_bounds = array<i64: 32, 1>}, {pipeline_mode = #tpu.pipeline_mode<synchronous>, transform_indices = @transform_8, window_bounds = array<i64: 32, 32>}, {pipeline_mode = #tpu.pipeline_mode<synchronous>, transform_indices = @transform_9, window_bounds = array<i64: 32, 1>}, {transform_indices = @transform_10, window_bounds = array<i64: 2, 32, 64>}]} {
    %c0 = arith.constant 0 : index
    %c0_0 = arith.constant 0 : index
    %0 = vector.load %arg3[%c0, %c0_0] : memref<32x32xf32, #tpu.memory_space<vmem>>, vector<32x32xf32>
    %c0_1 = arith.constant 0 : index
    %c0_2 = arith.constant 0 : index
    %1 = vector.load %arg5[%c0_1, %c0_2] : memref<32x32xf32, #tpu.memory_space<vmem>>, vector<32x32xf32>
    %c0_3 = arith.constant 0 : index
    %c0_4 = arith.constant 0 : index
    %2 = vector.load %arg7[%c0_3, %c0_4] : memref<32x32xf32, #tpu.memory_space<vmem>>, vector<32x32xf32>
    %c0_5 = arith.constant 0 : index
    %c0_6 = arith.constant 0 : index
    %3 = vector.load %arg9[%c0_5, %c0_6] : memref<32x32xf32, #tpu.memory_space<vmem>>, vector<32x32xf32>
    %c0_7 = arith.constant 0 : index
    %c0_8 = arith.constant 0 : index
    %4 = vector.load %arg4[%c0_7, %c0_8] : memref<32x1xf32, #tpu.memory_space<vmem>>, vector<32x1xf32>
    %c0_9 = arith.constant 0 : index
    %c0_10 = arith.constant 0 : index
    %5 = vector.load %arg6[%c0_9, %c0_10] : memref<32x1xf32, #tpu.memory_space<vmem>>, vector<32x1xf32>
    %c0_11 = arith.constant 0 : index
    %c0_12 = arith.constant 0 : index
    %6 = vector.load %arg8[%c0_11, %c0_12] : memref<32x1xf32, #tpu.memory_space<vmem>>, vector<32x1xf32>
    %c0_13 = arith.constant 0 : index
    %c0_14 = arith.constant 0 : index
    %7 = vector.load %arg10[%c0_13, %c0_14] : memref<32x1xf32, #tpu.memory_space<vmem>>, vector<32x1xf32>
    %8 = tpu.iota {dimensions = array<i32: 0>} : vector<64x64xi32>
    %9 = tpu.iota {dimensions = array<i32: 1>} : vector<64x64xi32>
    %10 = arith.cmpi eq, %8, %9 : vector<64x64xi32>
    %11 = arith.extui %10 : vector<64x64xi1> to vector<64x64xi32>
    %12 = arith.sitofp %11 : vector<64x64xi32> to vector<64x64xf32>
    %c0_15 = arith.constant 0 : index
    %c0_16 = arith.constant 0 : index
    %c0_17 = arith.constant 0 : index
    %13 = vector.load %arg1[%c0_15, %c0_16, %c0_17] : memref<2x32x64xf32, #tpu.memory_space<vmem>>, vector<1x32x64xf32>
    %14 = vector.shape_cast %13 : vector<1x32x64xf32> to vector<32x64xf32>
    %c0_18 = arith.constant 0 : index
    %c0_19 = arith.constant 0 : index
    %c0_20 = arith.constant 0 : index
    %15 = vector.load %arg2[%c0_18, %c0_19, %c0_20] : memref<2x32x64xf32, #tpu.memory_space<vmem>>, vector<1x32x64xf32>
    %16 = vector.shape_cast %15 : vector<1x32x64xf32> to vector<32x64xf32>
    %cst = arith.constant dense<0.000000e+00> : vector<32x64xf32>
    %17 = tpu.matmul %0, %16, %cst {dimension_numbers = #tpu.dot_dimension_numbers<[1], [0], [0], [1], [0, 0, 1, 1], [], []>} : vector<32x32xf32>, vector<32x64xf32>, vector<32x64xf32> -> vector<32x64xf32>
    %18 = vector.broadcast %4 : vector<32x1xf32> to vector<32x64xf32>
    %19 = arith.addf %17, %18 : vector<32x64xf32>
    %cst_21 = arith.constant dense<0.000000e+00> : vector<32x64xf32>
    %20 = tpu.matmul %1, %14, %cst_21 {dimension_numbers = #tpu.dot_dimension_numbers<[1], [0], [0], [1], [0, 0, 1, 1], [], []>} : vector<32x32xf32>, vector<32x64xf32>, vector<32x64xf32> -> vector<32x64xf32>
    %21 = vector.broadcast %5 : vector<32x1xf32> to vector<32x64xf32>
    %22 = arith.addf %20, %21 : vector<32x64xf32>
    %cst_22 = arith.constant dense<0.000000e+00> : vector<32x64xf32>
    %23 = tpu.matmul %2, %16, %cst_22 {dimension_numbers = #tpu.dot_dimension_numbers<[1], [0], [0], [1], [0, 0, 1, 1], [], []>} : vector<32x32xf32>, vector<32x64xf32>, vector<32x64xf32> -> vector<32x64xf32>
    %24 = vector.broadcast %6 : vector<32x1xf32> to vector<32x64xf32>
    %25 = arith.addf %23, %24 : vector<32x64xf32>
    %cst_23 = arith.constant dense<0.000000e+00> : vector<64x32xf32>
    %26 = tpu.matmul %12, %19, %cst_23 {dimension_numbers = #tpu.dot_dimension_numbers<[1], [1], [0], [0], [0, 0, 1, 0], [], []>} : vector<64x64xf32>, vector<32x64xf32>, vector<64x32xf32> -> vector<64x32xf32>
    %cst_24 = arith.constant 0.176776692 : f32
    %27 = vector.broadcast %cst_24 : f32 to vector<64x32xf32>
    %28 = arith.mulf %26, %27 : vector<64x32xf32>
    %cst_25 = arith.constant dense<0.000000e+00> : vector<64x64xf32>
    %29 = tpu.matmul %28, %22, %cst_25 {dimension_numbers = #tpu.dot_dimension_numbers<[1], [0], [0], [1], [0, 0, 1, 1], [], []>} : vector<64x32xf32>, vector<32x64xf32>, vector<64x64xf32> -> vector<64x64xf32>
    %cst_26 = arith.constant dense<0xFF800000> : vector<64xf32>
    %30 = vector.multi_reduction <maximumf>, %29, %cst_26 [1] : vector<64x64xf32> to vector<64xf32>
    %31 = vector.shape_cast %30 : vector<64xf32> to vector<64x1xf32>
    %32 = vector.broadcast %31 : vector<64x1xf32> to vector<64x64xf32>
    %33 = arith.subf %29, %32 : vector<64x64xf32>
    %34 = math.exp %33 : vector<64x64xf32>
    %cst_27 = arith.constant dense<0.000000e+00> : vector<64xf32>
    %35 = vector.multi_reduction <add>, %34, %cst_27 [1] : vector<64x64xf32> to vector<64xf32>
    %36 = vector.shape_cast %35 : vector<64xf32> to vector<64x1xf32>
    %37 = tpu.reciprocal %36 {approx = true} : vector<64x1xf32> -> vector<64x1xf32>
    %38 = vector.broadcast %37 : vector<64x1xf32> to vector<64x64xf32>
    %39 = arith.mulf %34, %38 : vector<64x64xf32>
    %cst_28 = arith.constant dense<0.000000e+00> : vector<32x64xf32>
    %40 = tpu.matmul %25, %39, %cst_28 {dimension_numbers = #tpu.dot_dimension_numbers<[1], [1], [0], [0], [0, 0, 1, 0], [], []>} : vector<32x64xf32>, vector<64x64xf32>, vector<32x64xf32> -> vector<32x64xf32>
    %cst_29 = arith.constant dense<0.000000e+00> : vector<32x64xf32>
    %41 = tpu.matmul %3, %40, %cst_29 {dimension_numbers = #tpu.dot_dimension_numbers<[1], [0], [0], [1], [0, 0, 1, 1], [], []>} : vector<32x32xf32>, vector<32x64xf32>, vector<32x64xf32> -> vector<32x64xf32>
    %42 = vector.broadcast %7 : vector<32x1xf32> to vector<32x64xf32>
    %43 = arith.addf %41, %42 : vector<32x64xf32>
    %44 = arith.addf %14, %43 : vector<32x64xf32>
    %cst_30 = arith.constant 5.000000e-01 : f32
    %45 = vector.broadcast %cst_30 : f32 to vector<32x64xf32>
    %46 = arith.mulf %44, %45 : vector<32x64xf32>
    %c0_31 = arith.constant 0 : index
    %c0_32 = arith.constant 0 : index
    %c0_33 = arith.constant 0 : index
    %47 = vector.load %arg11[%c0_31, %c0_32, %c0_33] : memref<2x32x64xf32, #tpu.memory_space<vmem>>, vector<1x32x64xf32>
    %48 = vector.shape_cast %47 : vector<1x32x64xf32> to vector<32x64xf32>
    %49 = vector.shape_cast %46 : vector<32x64xf32> to vector<1x32x64xf32>
    tpu.vector_store %arg11[%c0_31, %c0_32, %c0_33], %49 {strides = array<i32>} : memref<2x32x64xf32, #tpu.memory_space<vmem>>, vector<1x32x64xf32>,
    %c1 = arith.constant 1 : index
    %c0_34 = arith.constant 0 : index
    %c0_35 = arith.constant 0 : index
    %50 = vector.load %arg1[%c1, %c0_34, %c0_35] : memref<2x32x64xf32, #tpu.memory_space<vmem>>, vector<1x32x64xf32>
    %51 = vector.shape_cast %50 : vector<1x32x64xf32> to vector<32x64xf32>
    %c1_36 = arith.constant 1 : index
    %c0_37 = arith.constant 0 : index
    %c0_38 = arith.constant 0 : index
    %52 = vector.load %arg2[%c1_36, %c0_37, %c0_38] : memref<2x32x64xf32, #tpu.memory_space<vmem>>, vector<1x32x64xf32>
    %53 = vector.shape_cast %52 : vector<1x32x64xf32> to vector<32x64xf32>
    %cst_39 = arith.constant dense<0.000000e+00> : vector<32x64xf32>
    %54 = tpu.matmul %0, %53, %cst_39 {dimension_numbers = #tpu.dot_dimension_numbers<[1], [0], [0], [1], [0, 0, 1, 1], [], []>} : vector<32x32xf32>, vector<32x64xf32>, vector<32x64xf32> -> vector<32x64xf32>
    %55 = vector.broadcast %4 : vector<32x1xf32> to vector<32x64xf32>
    %56 = arith.addf %54, %55 : vector<32x64xf32>
    %cst_40 = arith.constant dense<0.000000e+00> : vector<32x64xf32>
    %57 = tpu.matmul %1, %51, %cst_40 {dimension_numbers = #tpu.dot_dimension_numbers<[1], [0], [0], [1], [0, 0, 1, 1], [], []>} : vector<32x32xf32>, vector<32x64xf32>, vector<32x64xf32> -> vector<32x64xf32>
    %58 = vector.broadcast %5 : vector<32x1xf32> to vector<32x64xf32>
    %59 = arith.addf %57, %58 : vector<32x64xf32>
    %cst_41 = arith.constant dense<0.000000e+00> : vector<32x64xf32>
    %60 = tpu.matmul %2, %53, %cst_41 {dimension_numbers = #tpu.dot_dimension_numbers<[1], [0], [0], [1], [0, 0, 1, 1], [], []>} : vector<32x32xf32>, vector<32x64xf32>, vector<32x64xf32> -> vector<32x64xf32>
    %61 = vector.broadcast %6 : vector<32x1xf32> to vector<32x64xf32>
    %62 = arith.addf %60, %61 : vector<32x64xf32>
    %cst_42 = arith.constant dense<0.000000e+00> : vector<64x32xf32>
    %63 = tpu.matmul %12, %56, %cst_42 {dimension_numbers = #tpu.dot_dimension_numbers<[1], [1], [0], [0], [0, 0, 1, 0], [], []>} : vector<64x64xf32>, vector<32x64xf32>, vector<64x32xf32> -> vector<64x32xf32>
    %cst_43 = arith.constant 0.176776692 : f32
    %64 = vector.broadcast %cst_43 : f32 to vector<64x32xf32>
    %65 = arith.mulf %63, %64 : vector<64x32xf32>
    %cst_44 = arith.constant dense<0.000000e+00> : vector<64x64xf32>
    %66 = tpu.matmul %65, %59, %cst_44 {dimension_numbers = #tpu.dot_dimension_numbers<[1], [0], [0], [1], [0, 0, 1, 1], [], []>} : vector<64x32xf32>, vector<32x64xf32>, vector<64x64xf32> -> vector<64x64xf32>
    %cst_45 = arith.constant dense<0xFF800000> : vector<64xf32>
    %67 = vector.multi_reduction <maximumf>, %66, %cst_45 [1] : vector<64x64xf32> to vector<64xf32>
    %68 = vector.shape_cast %67 : vector<64xf32> to vector<64x1xf32>
    %69 = vector.broadcast %68 : vector<64x1xf32> to vector<64x64xf32>
    %70 = arith.subf %66, %69 : vector<64x64xf32>
    %71 = math.exp %70 : vector<64x64xf32>
    %cst_46 = arith.constant dense<0.000000e+00> : vector<64xf32>
    %72 = vector.multi_reduction <add>, %71, %cst_46 [1] : vector<64x64xf32> to vector<64xf32>
    %73 = vector.shape_cast %72 : vector<64xf32> to vector<64x1xf32>
    %74 = tpu.reciprocal %73 {approx = true} : vector<64x1xf32> -> vector<64x1xf32>
    %75 = vector.broadcast %74 : vector<64x1xf32> to vector<64x64xf32>
    %76 = arith.mulf %71, %75 : vector<64x64xf32>
    %cst_47 = arith.constant dense<0.000000e+00> : vector<32x64xf32>
    %77 = tpu.matmul %62, %76, %cst_47 {dimension_numbers = #tpu.dot_dimension_numbers<[1], [1], [0], [0], [0, 0, 1, 0], [], []>} : vector<32x64xf32>, vector<64x64xf32>, vector<32x64xf32> -> vector<32x64xf32>
    %cst_48 = arith.constant dense<0.000000e+00> : vector<32x64xf32>
    %78 = tpu.matmul %3, %77, %cst_48 {dimension_numbers = #tpu.dot_dimension_numbers<[1], [0], [0], [1], [0, 0, 1, 1], [], []>} : vector<32x32xf32>, vector<32x64xf32>, vector<32x64xf32> -> vector<32x64xf32>
    %79 = vector.broadcast %7 : vector<32x1xf32> to vector<32x64xf32>
    %80 = arith.addf %78, %79 : vector<32x64xf32>
    %81 = arith.addf %51, %80 : vector<32x64xf32>
    %cst_49 = arith.constant 5.000000e-01 : f32
    %82 = vector.broadcast %cst_49 : f32 to vector<32x64xf32>
    %83 = arith.mulf %81, %82 : vector<32x64xf32>
    %c1_50 = arith.constant 1 : index
    %c0_51 = arith.constant 0 : index
    %c0_52 = arith.constant 0 : index
    %84 = vector.load %arg11[%c1_50, %c0_51, %c0_52] : memref<2x32x64xf32, #tpu.memory_space<vmem>>, vector<1x32x64xf32>
    %85 = vector.shape_cast %84 : vector<1x32x64xf32> to vector<32x64xf32>
    %86 = vector.shape_cast %83 : vector<32x64xf32> to vector<1x32x64xf32>
    tpu.vector_store %arg11[%c1_50, %c0_51, %c0_52], %86 {strides = array<i32>} : memref<2x32x64xf32, #tpu.memory_space<vmem>>, vector<1x32x64xf32>,
    return
  }
  func.func @transform_0(%arg0: i32) -> (i32, i32, i32) {
    %c0_i32 = arith.constant 0 : i32
    %c0_i32_0 = arith.constant 0 : i32
    %c0_i32_1 = arith.constant 0 : i32
    return %arg0, %c0_i32, %c0_i32_0 : i32, i32, i32
  }
  func.func @transform_1(%arg0: i32) -> (i32, i32, i32) {
    %c0_i32 = arith.constant 0 : i32
    %c0_i32_0 = arith.constant 0 : i32
    %c0_i32_1 = arith.constant 0 : i32
    return %arg0, %c0_i32, %c0_i32_0 : i32, i32, i32
  }
  func.func @transform_2(%arg0: i32) -> (i32, i32) {
    %c0_i32 = arith.constant 0 : i32
    %c0_i32_0 = arith.constant 0 : i32
    %c0_i32_1 = arith.constant 0 : i32
    return %c0_i32, %c0_i32_0 : i32, i32
  }
  func.func @transform_3(%arg0: i32) -> (i32, i32) {
    %c0_i32 = arith.constant 0 : i32
    %c0_i32_0 = arith.constant 0 : i32
    %c0_i32_1 = arith.constant 0 : i32
    return %c0_i32, %c0_i32_0 : i32, i32
  }
  func.func @transform_4(%arg0: i32) -> (i32, i32) {
    %c0_i32 = arith.constant 0 : i32
    %c0_i32_0 = arith.constant 0 : i32
    %c0_i32_1 = arith.constant 0 : i32
    return %c0_i32, %c0_i32_0 : i32, i32
  }
  func.func @transform_5(%arg0: i32) -> (i32, i32) {
    %c0_i32 = arith.constant 0 : i32
    %c0_i32_0 = arith.constant 0 : i32
    %c0_i32_1 = arith.constant 0 : i32
    return %c0_i32, %c0_i32_0 : i32, i32
  }
  func.func @transform_6(%arg0: i32) -> (i32, i32) {
    %c0_i32 = arith.constant 0 : i32
    %c0_i32_0 = arith.constant 0 : i32
    %c0_i32_1 = arith.constant 0 : i32
    return %c0_i32, %c0_i32_0 : i32, i32
  }
  func.func @transform_7(%arg0: i32) -> (i32, i32) {
    %c0_i32 = arith.constant 0 : i32
    %c0_i32_0 = arith.constant 0 : i32
    %c0_i32_1 = arith.constant 0 : i32
    return %c0_i32, %c0_i32_0 : i32, i32
  }
  func.func @transform_8(%arg0: i32) -> (i32, i32) {
    %c0_i32 = arith.constant 0 : i32
    %c0_i32_0 = arith.constant 0 : i32
    %c0_i32_1 = arith.constant 0 : i32
    return %c0_i32, %c0_i32_0 : i32, i32
  }
  func.func @transform_9(%arg0: i32) -> (i32, i32) {
    %c0_i32 = arith.constant 0 : i32
    %c0_i32_0 = arith.constant 0 : i32
    %c0_i32_1 = arith.constant 0 : i32
    return %c0_i32, %c0_i32_0 : i32, i32
  }
  func.func @transform_10(%arg0: i32) -> (i32, i32, i32) {
    %c0_i32 = arith.constant 0 : i32
    %c0_i32_0 = arith.constant 0 : i32
    %c0_i32_1 = arith.constant 0 : i32
    return %arg0, %c0_i32, %c0_i32_0 : i32, i32, i32
  }
}

</mosaic_0001>

<llo_original>
// kernel: tpu_custom_call.1
$region0: #{tpu_custom_call.1}
  #allocation0 [shape = 'u32[]', space=smem, size = 0x4, offset = 0x4, fixed_abs, tag = 'smem constant byte address 0x4 - core index']
  #allocation1 [shape = 'u32[144,128]{1,0:T(1,128)}', space=vmem, size = 0x12000, scoped, tag = 'internal scratch']
  %s0 = inlined_call_operand.vmem [shape: f32[2,32,64], index: 0, kind: input, shape index: {}]
  %s1 = inlined_call_operand.vmem [shape: f32[2,32,64], index: 1, kind: input, shape index: {}]
  %s2 = inlined_call_operand.hbm [shape: f32[32,32], index: 2, kind: input, shape index: {}]
  %s3 = inlined_call_operand.vmem [shape: f32[32,1], index: 3, kind: input, shape index: {}]
  %s4 = inlined_call_operand.hbm [shape: f32[32,32], index: 4, kind: input, shape index: {}]
  %s5 = inlined_call_operand.vmem [shape: f32[32,1], index: 5, kind: input, shape index: {}]
  %s6 = inlined_call_operand.hbm [shape: f32[32,32], index: 6, kind: input, shape index: {}]
  %s7 = inlined_call_operand.vmem [shape: f32[32,1], index: 7, kind: input, shape index: {}]
  %s8 = inlined_call_operand.vmem [shape: f32[32,32], index: 8, kind: input, shape index: {}]
  %s9 = inlined_call_operand.vmem [shape: f32[32,1], index: 9, kind: input, shape index: {}]
  %s10 = inlined_call_operand.hbm [shape: f32[2,32,64], index: 10, kind: output, shape index: {}]
  %s11 = sld [smem:[#allocation0]]
  $region62: #{tpu_custom_call.1} parent=0
    _
  %s13 = ssub.s32 1, %s11
  %s14 = scalar_select 0, %s13, %s11
  $region1: #{tpu_custom_call.1} parent=0
    #allocation2 [shape = 'u8[16384]{0}', space=vmem, size = 0x4000, scoped, tag = 'input window, operand 2, single buffered']
    #allocation3 [shape = 's32[1]{0}', space=sflag, size = 0x4, scoped, tag = 'scoped memory for tpu_custom_call.1']
    #allocation4 [shape = 's32[1]{0}', space=sflag, size = 0x4, scoped, tag = 'scoped memory for tpu_custom_call.1']
    #allocation5 [shape = 'u8[16384]{0}', space=vmem, size = 0x4000, scoped, tag = 'input window, operand 4, single buffered']
    #allocation6 [shape = 's32[1]{0}', space=sflag, size = 0x4, scoped, tag = 'scoped memory for tpu_custom_call.1']
    #allocation7 [shape = 'u8[16384]{0}', space=vmem, size = 0x4000, scoped, tag = 'input window, operand 6, single buffered']
    #allocation8 [shape = 'u8[32768]{0}', space=vmem, size = 0x8000, scoped, tag = 'output window, operand 0, single buffered']
    %15 = vsyncpa [#allocation3], 0
    %16 = vsyncpa [#allocation6], 0
    %17 = vsyncpa [#allocation4], 0
    // Predicated region
    $region2: #{tpu_custom_call.1} parent=1 // pred_check
      _
    $region3: #{tpu_custom_call.1} parent=1 // pred_check_branch
      %19 = sbr.rel (0) target = $region5
    $region4: #{tpu_custom_call.1} parent=1 // pred_region
      _
    $region5: #{tpu_custom_call.1} parent=1 // pred_fallthru
      _
    // Predicated region
    $region6: #{tpu_custom_call.1} parent=1 // pred_check
      _
    $region7: #{tpu_custom_call.1} parent=1 // pred_check_branch
      %21 = sbr.rel (0) target = $region9
    $region8: #{tpu_custom_call.1} parent=1 // pred_region
      _
    $region9: #{tpu_custom_call.1} parent=1 // pred_fallthru
      _
    // Predicated region
    $region10: #{tpu_custom_call.1} parent=1 // pred_check
      _
    $region11: #{tpu_custom_call.1} parent=1 // pred_check_branch
      %23 = sbr.rel (0) target = $region13
    $region12: #{tpu_custom_call.1} parent=1 // pred_region
      %s25 = ssub.s32 512, 512
      %26 = vsyncadd [#allocation3], %s25
      %s27 = sshll.u32 [#allocation2], 4
      %s28 = int_to_ptr.vmem [resolvable:$true] %s27
      %33 = dma.hbm_to_vmem [thread:$0]  %s2, 512, %s28, [#allocation3], 128, 128, 8
    $region13: #{tpu_custom_call.1} parent=1 // pred_fallthru
      _
    // Predicated region
    $region14: #{tpu_custom_call.1} parent=1 // pred_check
      _
    $region15: #{tpu_custom_call.1} parent=1 // pred_check_branch
      %35 = sbr.rel (0) target = $region17
    $region16: #{tpu_custom_call.1} parent=1 // pred_region
      _
    $region17: #{tpu_custom_call.1} parent=1 // pred_fallthru
      _
    // Predicated region
    $region18: #{tpu_custom_call.1} parent=1 // pred_check
      _
    $region19: #{tpu_custom_call.1} parent=1 // pred_check_branch
      %37 = sbr.rel (0) target = $region21
    $region20: #{tpu_custom_call.1} parent=1 // pred_region
      %s39 = ssub.s32 512, 512
      %40 = vsyncadd [#allocation6], %s39
      %s41 = sshll.u32 [#allocation5], 4
      %s42 = int_to_ptr.vmem [resolvable:$true] %s41
      %47 = dma.hbm_to_vmem [thread:$0]  %s4, 512, %s42, [#allocation6], 128, 128, 8
    $region21: #{tpu_custom_call.1} parent=1 // pred_fallthru
      _
    // Predicated region
    $region22: #{tpu_custom_call.1} parent=1 // pred_check
      _
    $region23: #{tpu_custom_call.1} parent=1 // pred_check_branch
      %49 = sbr.rel (0) target = $region25
    $region24: #{tpu_custom_call.1} parent=1 // pred_region
      _
    $region25: #{tpu_custom_call.1} parent=1 // pred_fallthru
      _
    // Predicated region
    $region26: #{tpu_custom_call.1} parent=1 // pred_check
      _
    $region27: #{tpu_custom_call.1} parent=1 // pred_check_branch
      %51 = sbr.rel (0) target = $region29
    $region28: #{tpu_custom_call.1} parent=1 // pred_region
      %s53 = ssub.s32 512, 512
      %54 = vsyncadd [#allocation6], %s53
      %s55 = sshll.u32 [#allocation7], 4
      %s56 = int_to_ptr.vmem [resolvable:$true] %s55
      %61 = dma.hbm_to_vmem [thread:$0]  %s6, 512, %s56, [#allocation6], 128, 128, 8
    $region29: #{tpu_custom_call.1} parent=1 // pred_fallthru
      _
    // Predicated region
    $region30: #{tpu_custom_call.1} parent=1 // pred_check
      _
    $region31: #{tpu_custom_call.1} parent=1 // pred_check_branch
      %63 = sbr.rel (0) target = $region33
    $region32: #{tpu_custom_call.1} parent=1 // pred_region
      _
    $region33: #{tpu_custom_call.1} parent=1 // pred_fallthru
      _
    // Predicated region
    $region34: #{tpu_custom_call.1} parent=1 // pred_check
      _
    $region35: #{tpu_custom_call.1} parent=1 // pred_check_branch
      %65 = sbr.rel (0) target = $region37
    $region36: #{tpu_custom_call.1} parent=1 // pred_region
      _
    $region37: #{tpu_custom_call.1} parent=1 // pred_fallthru
      _
    // Predicated region
    $region38: #{tpu_custom_call.1} parent=1 // pred_check
      _
    $region39: #{tpu_custom_call.1} parent=1 // pred_check_branch
      %67 = sbr.rel (0) target = $region41
    $region40: #{tpu_custom_call.1} parent=1 // pred_region
      _
    $region41: #{tpu_custom_call.1} parent=1 // pred_fallthru
      _
    // Predicated region
    $region42: #{tpu_custom_call.1} parent=1 // pred_check
      _
    $region43: #{tpu_custom_call.1} parent=1 // pred_check_branch
      %69 = sbr.rel (0) target = $region45
    $region44: #{tpu_custom_call.1} parent=1 // pred_region
      %70 = dma.done [#allocation3], 512
    $region45: #{tpu_custom_call.1} parent=1 // pred_fallthru
      _
    // Predicated region
    $region46: #{tpu_custom_call.1} parent=1 // pred_check
      _
    $region47: #{tpu_custom_call.1} parent=1 // pred_check_branch
      %72 = sbr.rel (0) target = $region49
    $region48: #{tpu_custom_call.1} parent=1 // pred_region
      %73 = dma.done [#allocation6], 512
    $region49: #{tpu_custom_call.1} parent=1 // pred_fallthru
      _
    // Predicated region
    $region50: #{tpu_custom_call.1} parent=1 // pred_check
      _
    $region51: #{tpu_custom_call.1} parent=1 // pred_check_branch
      %75 = sbr.rel (0) target = $region53
    $region52: #{tpu_custom_call.1} parent=1 // pred_region
      %76 = dma.done [#allocation6], 512
    $region53: #{tpu_custom_call.1} parent=1 // pred_fallthru
      _
    %v77 = vld [vmem:[#allocation2] sm:$0xff]
    %v78 = vld [vmem:[#allocation2 + $0x8] sm:$0xff]
    %v79 = vld [vmem:[#allocation2 + $0x10] sm:$0xff]
    %v80 = vld [vmem:[#allocation2 + $0x18] sm:$0xff]
    %v81 = vld [vmem:[#allocation5] sm:$0xff]
    %v82 = vld [vmem:[#allocation5 + $0x8] sm:$0xff]
    %v83 = vld [vmem:[#allocation5 + $0x10] sm:$0xff]
    %v84 = vld [vmem:[#allocation5 + $0x18] sm:$0xff]
    %v85 = vld [vmem:[#allocation7] sm:$0xff]
    %v86 = vld [vmem:[#allocation7 + $0x8] sm:$0xff]
    %v87 = vld [vmem:[#allocation7 + $0x10] sm:$0xff]
    %v88 = vld [vmem:[#allocation7 + $0x18] sm:$0xff]
    %v89 = vld [vmem:[%s8] sm:$0xff]
    %v90 = vld [vmem:[%s8 + $0x8] sm:$0xff]
    %v91 = vld [vmem:[%s8 + $0x10] sm:$0xff]
    %v92 = vld [vmem:[%s8 + $0x18] sm:$0xff]
    %v93 = vld [vmem:[%s3] sm:$0xff]
    %v94 = vld [vmem:[%s3 + $0x8] sm:$0xff]
    %v95 = vld [vmem:[%s3 + $0x10] sm:$0xff]
    %v96 = vld [vmem:[%s3 + $0x18] sm:$0xff]
    %v97 = vld [vmem:[%s5] sm:$0xff]
    %v98 = vld [vmem:[%s5 + $0x8] sm:$0xff]
    %v99 = vld [vmem:[%s5 + $0x10] sm:$0xff]
    %v100 = vld [vmem:[%s5 + $0x18] sm:$0xff]
    %v101 = vld [vmem:[%s7] sm:$0xff]
    %v102 = vld [vmem:[%s7 + $0x8] sm:$0xff]
    %v103 = vld [vmem:[%s7 + $0x10] sm:$0xff]
    %v104 = vld [vmem:[%s7 + $0x18] sm:$0xff]
    %v105 = vld [vmem:[%s9] sm:$0xff]
    %v106 = vld [vmem:[%s9 + $0x8] sm:$0xff]
    %v107 = vld [vmem:[%s9 + $0x10] sm:$0xff]
    %v108 = vld [vmem:[%s9 + $0x18] sm:$0xff]
    %v109 = vlaneseq
    %v110 = vshrl.u32 %v109, 7
    %v111 = vadd.s32 %v110, 8
    %v112 = vadd.s32 %v110, 16
    %v113 = vadd.s32 %v110, 24
    %v114 = vadd.s32 %v110, 32
    %v115 = vadd.s32 %v110, 40
    %v116 = vadd.s32 %v110, 48
    %v117 = vadd.s32 %v110, 56
    %v118 = vlaneseq
    %v119 = vand.u32 %v118, 127
    %vm120 = vcmp.eq.s32.totalorder %v110, %v119
    %vm121 = vcmp.eq.s32.totalorder %v111, %v119
    %vm122 = vcmp.eq.s32.totalorder %v112, %v119
    %vm123 = vcmp.eq.s32.totalorder %v113, %v119
    %vm124 = vcmp.eq.s32.totalorder %v114, %v119
    %vm125 = vcmp.eq.s32.totalorder %v115, %v119
    %vm126 = vcmp.eq.s32.totalorder %v116, %v119
    %vm127 = vcmp.eq.s32.totalorder %v117, %v119
    %v128 = vsel %vm120, 1, 0
    %v129 = vsel %vm121, 1, 0
    %v130 = vsel %vm122, 1, 0
    %v131 = vsel %vm123, 1, 0
    %v132 = vsel %vm124, 1, 0
    %v133 = vsel %vm125, 1, 0
    %v134 = vsel %vm126, 1, 0
    %v135 = vsel %vm127, 1, 0
    %v136 = vcvt.s32.f32 %v128
    %v137 = vcvt.s32.f32 %v129
    %v138 = vcvt.s32.f32 %v130
    %v139 = vcvt.s32.f32 %v131
    %v140 = vcvt.s32.f32 %v132
    %v141 = vcvt.s32.f32 %v133
    %v142 = vcvt.s32.f32 %v134
    %v143 = vcvt.s32.f32 %v135
    %v144 = vld [vmem:[%s0] sm:$0xff]
    %v145 = vld [vmem:[%s0 + $0x8] sm:$0xff]
    %v146 = vld [vmem:[%s0 + $0x10] sm:$0xff]
    %v147 = vld [vmem:[%s0 + $0x18] sm:$0xff]
    %v148 = vld [vmem:[%s1] sm:$0xff]
    %v149 = vld [vmem:[%s1 + $0x8] sm:$0xff]
    %v150 = vld [vmem:[%s1 + $0x10] sm:$0xff]
    %v151 = vld [vmem:[%s1 + $0x18] sm:$0xff]
    %153 = vset.pattern.permute.xlu0 0
    %154 = vperm.xlu0 %153, %v93
    %v155 = vpop.permute.xlu0 %154
    %158 = vset.pattern.permute.xlu0 0
    %159 = vperm.xlu0 %158, %v94
    %v160 = vpop.permute.xlu0 %159
    %163 = vset.pattern.permute.xlu0 0
    %164 = vperm.xlu0 %163, %v95
    %v165 = vpop.permute.xlu0 %164
    %168 = vset.pattern.permute.xlu0 0
    %169 = vperm.xlu0 %168, %v96
    %v170 = vpop.permute.xlu0 %169
    %vm172 = vcmask 261120
    %v174 = vsel %vm172, %v77, 0
    %v177 = vsel %vm172, %v78, 0
    %v180 = vsel %vm172, %v79, 0
    %v183 = vsel %vm172, %v80, 0
    %185 = vmatprep.subr.mxu0 0.0
    %186 = vmatpush1.msra.mxu0 %v148
    %187 = vmatprep.subr.mxu0 0.0
    %188 = vmatpush1.msra.mxu0 %v149
    %189 = vmatprep.subr.mxu0 0.0
    %190 = vmatpush1.msra.mxu0 %v150
    %191 = vmatprep.subr.mxu0 0.0
    %192 = vmatpush1.msra.mxu0 %v151
    %193 = vmatprep.subr.mxu0 0.0
    %194 = vmatpush1.msra.mxu0 0.0
    %195 = vmatprep.subr.mxu0 0.0
    %196 = vmatpush1.msra.mxu0 0.0
    %197 = vmatprep.subr.mxu0 0.0
    %198 = vmatpush1.msra.mxu0 0.0
    %199 = vmatprep.subr.mxu0 0.0
    %200 = vmatpush1.msra.mxu0 0.0
    %201 = vmatprep.subr.mxu0 0.0
    %202 = vmatpush1.msra.mxu0 0.0
    %203 = vmatprep.subr.mxu0 0.0
    %204 = vmatpush1.msra.mxu0 0.0
    %205 = vmatprep.subr.mxu0 0.0
    %206 = vmatpush1.msra.mxu0 0.0
    %207 = vmatprep.subr.mxu0 0.0
    %208 = vmatpush1.msra.mxu0 0.0
    %209 = vmatprep.subr.mxu0 0.0
    %210 = vmatpush1.msra.mxu0 0.0
    %211 = vmatprep.subr.mxu0 0.0
    %212 = vmatpush1.msra.mxu0 0.0
    %213 = vmatprep.subr.mxu0 0.0
    %214 = vmatpush1.msra.mxu0 0.0
    %215 = vmatprep.subr.mxu0 0.0
    %216 = vmatpush1.msra.mxu0 0.0
    %217 = vmatprep.subr.mxu0 0.0
    %218 = vmatpush1.msra.mxu0 0.0
    %219 = vmatprep.subr.mxu0 0.0
    %220 = vmatpush1.msra.mxu0 0.0
    %221 = vmatprep.subr.mxu0 0.0
    %222 = vmatpush1.msra.mxu0 0.0
    %223 = vmatprep.subr.mxu0 0.0
    %224 = vmatpush1.msra.mxu0 0.0
    %225 = vmatprep.subr.mxu0 0.0
    %226 = vmatpush1.msra.mxu0 0.0
    %227 = vmatprep.subr.mxu0 0.0
    %228 = vmatpush1.msra.mxu0 0.0
    %229 = vmatprep.subr.mxu0 0.0
    %230 = vmatpush1.msra.mxu0 0.0
    %231 = vmatprep.subr.mxu0 0.0
    %232 = vmatpush1.msra.mxu0 0.0
    %233 = vmatprep.subr.mxu0 0.0
    %234 = vmatpush1.msra.mxu0 0.0
    %235 = vmatprep.subr.mxu0 0.0
    %236 = vmatpush1.msra.mxu0 0.0
    %237 = vmatprep.subr.mxu0 0.0
    %238 = vmatpush1.msra.mxu0 0.0
    %239 = vmatprep.subr.mxu0 0.0
    %240 = vmatpush1.msra.mxu0 0.0
    %241 = vmatprep.subr.mxu0 0.0
    %242 = vmatpush1.msra.mxu0 0.0
    %243 = vmatprep.subr.mxu0 0.0
    %244 = vmatpush1.msra.mxu0 0.0
    %245 = vmatprep.subr.mxu0 0.0
    %246 = vmatpush1.msra.mxu0 0.0
    %247 = vmatprep.subr.mxu0 0.0
    %248 = vmatpush1.msra.mxu0 0.0
    %249 = vmatprep.mubr.f32.mxu0 0.0
    %250 = vmatmul.mubr.f32.gmra.mrb[0].mxu0 %v174
    %v251 = vpop.f32.mrb[0].mxu0
    %v252 = vadd.f32 %v155, %v251
    %v253 = vpop.f32.mrb[0].mxu0
    %254 = vmatprep.mubr.f32.mxu0 0.0
    %255 = vmatmul.mubr.f32.gmra.mrb[0].mxu0 %v177
    %v256 = vpop.f32.mrb[0].mxu0
    %v257 = vadd.f32 %v160, %v256
    %v258 = vpop.f32.mrb[0].mxu0
    %259 = vmatprep.mubr.f32.mxu0 0.0
    %260 = vmatmul.mubr.f32.gmra.mrb[0].mxu0 %v180
    %v261 = vpop.f32.mrb[0].mxu0
    %v262 = vadd.f32 %v165, %v261
    %v263 = vpop.f32.mrb[0].mxu0
    %264 = vmatprep.mubr.f32.mxu0 0.0
    %265 = vmatmul.mubr.f32.gmra.mrb[0].mxu0 %v183
    %v266 = vpop.f32.mrb[0].mxu0
    %v267 = vadd.f32 %v170, %v266
    %v268 = vpop.f32.mrb[0].mxu0
    %269 = vdwg.mxu0
    %271 = vset.pattern.permute.xlu0 0
    %272 = vperm.xlu0 %271, %v97
    %v273 = vpop.permute.xlu0 %272
    %276 = vset.pattern.permute.xlu0 0
    %277 = vperm.xlu0 %276, %v98
    %v278 = vpop.permute.xlu0 %277
    %281 = vset.pattern.permute.xlu0 0
    %282 = vperm.xlu0 %281, %v99
    %v283 = vpop.permute.xlu0 %282
    %286 = vset.pattern.permute.xlu0 0
    %287 = vperm.xlu0 %286, %v100
    %v288 = vpop.permute.xlu0 %287
    %v291 = vsel %vm172, %v81, 0
    %v294 = vsel %vm172, %v82, 0
    %v297 = vsel %vm172, %v83, 0
    %v300 = vsel %vm172, %v84, 0
    %302 = vmatprep.subr.mxu0 0.0
    %303 = vmatpush1.msra.mxu0 %v144
    %304 = vmatprep.subr.mxu0 0.0
    %305 = vmatpush1.msra.mxu0 %v145
    %306 = vmatprep.subr.mxu0 0.0
    %307 = vmatpush1.msra.mxu0 %v146
    %308 = vmatprep.subr.mxu0 0.0
    %309 = vmatpush1.msra.mxu0 %v147
    %310 = vmatprep.subr.mxu0 0.0
    %311 = vmatpush1.msra.mxu0 0.0
    %312 = vmatprep.subr.mxu0 0.0
    %313 = vmatpush1.msra.mxu0 0.0
    %314 = vmatprep.subr.mxu0 0.0
    %315 = vmatpush1.msra.mxu0 0.0
    %316 = vmatprep.subr.mxu0 0.0
    %317 = vmatpush1.msra.mxu0 0.0
    %318 = vmatprep.subr.mxu0 0.0
    %319 = vmatpush1.msra.mxu0 0.0
    %320 = vmatprep.subr.mxu0 0.0
    %321 = vmatpush1.msra.mxu0 0.0
    %322 = vmatprep.subr.mxu0 0.0
    %323 = vmatpush1.msra.mxu0 0.0
    %324 = vmatprep.subr.mxu0 0.0
    %325 = vmatpush1.msra.mxu0 0.0
    %326 = vmatprep.subr.mxu0 0.0
    %327 = vmatpush1.msra.mxu0 0.0
    %328 = vmatprep.subr.mxu0 0.0
    %329 = vmatpush1.msra.mxu0 0.0
    %330 = vmatprep.subr.mxu0 0.0
    %331 = vmatpush1.msra.mxu0 0.0
    %332 = vmatprep.subr.mxu0 0.0
    %333 = vmatpush1.msra.mxu0 0.0
    %334 = vmatprep.subr.mxu0 0.0
    %335 = vmatpush1.msra.mxu0 0.0
    %336 = vmatprep.subr.mxu0 0.0
    %337 = vmatpush1.msra.mxu0 0.0
    %338 = vmatprep.subr.mxu0 0.0
    %339 = vmatpush1.msra.mxu0 0.0
    %340 = vmatprep.subr.mxu0 0.0
    %341 = vmatpush1.msra.mxu0 0.0
    %342 = vmatprep.subr.mxu0 0.0
    %343 = vmatpush1.msra.mxu0 0.0
    %344 = vmatprep.subr.mxu0 0.0
    %345 = vmatpush1.msra.mxu0 0.0
    %346 = vmatprep.subr.mxu0 0.0
    %347 = vmatpush1.msra.mxu0 0.0
    %348 = vmatprep.subr.mxu0 0.0
    %349 = vmatpush1.msra.mxu0 0.0
    %350 = vmatprep.subr.mxu0 0.0
    %351 = vmatpush1.msra.mxu0 0.0
    %352 = vmatprep.subr.mxu0 0.0
    %353 = vmatpush1.msra.mxu0 0.0
    %354 = vmatprep.subr.mxu0 0.0
    %355 = vmatpush1.msra.mxu0 0.0
    %356 = vmatprep.subr.mxu0 0.0
    %357 = vmatpush1.msra.mxu0 0.0
    %358 = vmatprep.subr.mxu0 0.0
    %359 = vmatpush1.msra.mxu0 0.0
    %360 = vmatprep.subr.mxu0 0.0
    %361 = vmatpush1.msra.mxu0 0.0
    %362 = vmatprep.subr.mxu0 0.0
    %363 = vmatpush1.msra.mxu0 0.0
    %364 = vmatprep.subr.mxu0 0.0
    %365 = vmatpush1.msra.mxu0 0.0
    %366 = vmatprep.mubr.f32.mxu0 0.0
    %367 = vmatmul.mubr.f32.gmra.mrb[0].mxu0 %v291
    %v368 = vpop.f32.mrb[0].mxu0
    %v369 = vadd.f32 %v273, %v368
    %v370 = vpop.f32.mrb[0].mxu0
    %371 = vmatprep.mubr.f32.mxu0 0.0
    %372 = vmatmul.mubr.f32.gmra.mrb[0].mxu0 %v294
    %v373 = vpop.f32.mrb[0].mxu0
    %v374 = vadd.f32 %v278, %v373
    %v375 = vpop.f32.mrb[0].mxu0
    %376 = vmatprep.mubr.f32.mxu0 0.0
    %377 = vmatmul.mubr.f32.gmra.mrb[0].mxu0 %v297
    %v378 = vpop.f32.mrb[0].mxu0
    %v379 = vadd.f32 %v283, %v378
    %v380 = vpop.f32.mrb[0].mxu0
    %381 = vmatprep.mubr.f32.mxu0 0.0
    %382 = vmatmul.mubr.f32.gmra.mrb[0].mxu0 %v300
    %v383 = vpop.f32.mrb[0].mxu0
    %v384 = vadd.f32 %v288, %v383
    %v385 = vpop.f32.mrb[0].mxu0
    %386 = vdwg.mxu0
    %388 = vset.pattern.permute.xlu0 0
    %389 = vperm.xlu0 %388, %v101
    %v390 = vpop.permute.xlu0 %389
    %393 = vset.pattern.permute.xlu0 0
    %394 = vperm.xlu0 %393, %v102
    %v395 = vpop.permute.xlu0 %394
    %398 = vset.pattern.permute.xlu0 0
    %399 = vperm.xlu0 %398, %v103
    %v400 = vpop.permute.xlu0 %399
    %403 = vset.pattern.permute.xlu0 0
    %404 = vperm.xlu0 %403, %v104
    %v405 = vpop.permute.xlu0 %404
    %v408 = vsel %vm172, %v85, 0
    %v411 = vsel %vm172, %v86, 0
    %v414 = vsel %vm172, %v87, 0
    %v417 = vsel %vm172, %v88, 0
    %419 = vmatprep.subr.mxu0 0.0
    %420 = vmatpush1.msra.mxu0 %v148
    %421 = vmatprep.subr.mxu0 0.0
    %422 = vmatpush1.msra.mxu0 %v149
    %423 = vmatprep.subr.mxu0 0.0
    %424 = vmatpush1.msra.mxu0 %v150
    %425 = vmatprep.subr.mxu0 0.0
    %426 = vmatpush1.msra.mxu0 %v151
    %427 = vmatprep.subr.mxu0 0.0
    %428 = vmatpush1.msra.mxu0 0.0
    %429 = vmatprep.subr.mxu0 0.0
    %430 = vmatpush1.msra.mxu0 0.0
    %431 = vmatprep.subr.mxu0 0.0
    %432 = vmatpush1.msra.mxu0 0.0
    %433 = vmatprep.subr.mxu0 0.0
    %434 = vmatpush1.msra.mxu0 0.0
    %435 = vmatprep.subr.mxu0 0.0
    %436 = vmatpush1.msra.mxu0 0.0
    %437 = vmatprep.subr.mxu0 0.0
    %438 = vmatpush1.msra.mxu0 0.0
    %439 = vmatprep.subr.mxu0 0.0
    %440 = vmatpush1.msra.mxu0 0.0
    %441 = vmatprep.subr.mxu0 0.0
    %442 = vmatpush1.msra.mxu0 0.0
    %443 = vmatprep.subr.mxu0 0.0
    %444 = vmatpush1.msra.mxu0 0.0
    %445 = vmatprep.subr.mxu0 0.0
    %446 = vmatpush1.msra.mxu0 0.0
    %447 = vmatprep.subr.mxu0 0.0
    %448 = vmatpush1.msra.mxu0 0.0
    %449 = vmatprep.subr.mxu0 0.0
    %450 = vmatpush1.msra.mxu0 0.0
    %451 = vmatprep.subr.mxu0 0.0
    %452 = vmatpush1.msra.mxu0 0.0
    %453 = vmatprep.subr.mxu0 0.0
    %454 = vmatpush1.msra.mxu0 0.0
    %455 = vmatprep.subr.mxu0 0.0
    %456 = vmatpush1.msra.mxu0 0.0
    %457 = vmatprep.subr.mxu0 0.0
    %458 = vmatpush1.msra.mxu0 0.0
    %459 = vmatprep.subr.mxu0 0.0
    %460 = vmatpush1.msra.mxu0 0.0
    %461 = vmatprep.subr.mxu0 0.0
    %462 = vmatpush1.msra.mxu0 0.0
    %463 = vmatprep.subr.mxu0 0.0
    %464 = vmatpush1.msra.mxu0 0.0
    %465 = vmatprep.subr.mxu0 0.0
    %466 = vmatpush1.msra.mxu0 0.0
    %467 = vmatprep.subr.mxu0 0.0
    %468 = vmatpush1.msra.mxu0 0.0
    %469 = vmatprep.subr.mxu0 0.0
    %470 = vmatpush1.msra.mxu0 0.0
    %471 = vmatprep.subr.mxu0 0.0
    %472 = vmatpush1.msra.mxu0 0.0
    %473 = vmatprep.subr.mxu0 0.0
    %474 = vmatpush1.msra.mxu0 0.0
    %475 = vmatprep.subr.mxu0 0.0
    %476 = vmatpush1.msra.mxu0 0.0
    %477 = vmatprep.subr.mxu0 0.0
    %478 = vmatpush1.msra.mxu0 0.0
    %479 = vmatprep.subr.mxu0 0.0
    %480 = vmatpush1.msra.mxu0 0.0
    %481 = vmatprep.subr.mxu0 0.0
    %482 = vmatpush1.msra.mxu0 0.0
    %483 = vmatprep.mubr.f32.mxu0 0.0
    %484 = vmatmul.mubr.f32.gmra.mrb[0].mxu0 %v408
    %v485 = vpop.f32.mrb[0].mxu0
    %v486 = vadd.f32 %v390, %v485
    %v487 = vpop.f32.mrb[0].mxu0
    %488 = vmatprep.mubr.f32.mxu0 0.0
    %489 = vmatmul.mubr.f32.gmra.mrb[0].mxu0 %v411
    %v490 = vpop.f32.mrb[0].mxu0
    %v491 = vadd.f32 %v395, %v490
    %v492 = vpop.f32.mrb[0].mxu0
    %493 = vmatprep.mubr.f32.mxu0 0.0
    %494 = vmatmul.mubr.f32.gmra.mrb[0].mxu0 %v414
    %v495 = vpop.f32.mrb[0].mxu0
    %v496 = vadd.f32 %v400, %v495
    %v497 = vpop.f32.mrb[0].mxu0
    %498 = vmatprep.mubr.f32.mxu0 0.0
    %499 = vmatmul.mubr.f32.gmra.mrb[0].mxu0 %v417
    %v500 = vpop.f32.mrb[0].mxu0
    %v501 = vadd.f32 %v405, %v500
    %v502 = vpop.f32.mrb[0].mxu0
    %503 = vdwg.mxu0
    %vm504 = vcmask 523264
    %v506 = vsel %vm504, %v136, 0
    %v509 = vsel %vm504, %v137, 0
    %v512 = vsel %vm504, %v138, 0
    %v515 = vsel %vm504, %v139, 0
    %v518 = vsel %vm504, %v140, 0
    %v521 = vsel %vm504, %v141, 0
    %v524 = vsel %vm504, %v142, 0
    %v527 = vsel %vm504, %v143, 0
    %v530 = vsel %vm504, %v252, 0
    %v533 = vsel %vm504, %v257, 0
    %v536 = vsel %vm504, %v262, 0
    %v539 = vsel %vm504, %v267, 0
    %541 = vmatprep.subr.mxu0 0.0
    %542 = vmatpush1.xpose.msra.mxu0 %v530
    %543 = vmatprep.subr.mxu0 0.0
    %544 = vmatpush1.xpose.msra.mxu0 %v533
    %545 = vmatprep.subr.mxu0 0.0
    %546 = vmatpush1.xpose.msra.mxu0 %v536
    %547 = vmatprep.subr.mxu0 0.0
    %548 = vmatpush1.xpose.msra.mxu0 %v539
    %549 = vmatprep.subr.mxu0 0.0
    %550 = vmatpush1.xpose.msra.mxu0 0.0
    %551 = vmatprep.subr.mxu0 0.0
    %552 = vmatpush1.xpose.msra.mxu0 0.0
    %553 = vmatprep.subr.mxu0 0.0
    %554 = vmatpush1.xpose.msra.mxu0 0.0
    %555 = vmatprep.subr.mxu0 0.0
    %556 = vmatpush1.xpose.msra.mxu0 0.0
    %557 = vmatprep.subr.mxu0 0.0
    %558 = vmatpush1.xpose.msra.mxu0 0.0
    %559 = vmatprep.subr.mxu0 0.0
    %560 = vmatpush1.xpose.msra.mxu0 0.0
    %561 = vmatprep.subr.mxu0 0.0
    %562 = vmatpush1.xpose.msra.mxu0 0.0
    %563 = vmatprep.subr.mxu0 0.0
    %564 = vmatpush1.xpose.msra.mxu0 0.0
    %565 = vmatprep.subr.mxu0 0.0
    %566 = vmatpush1.xpose.msra.mxu0 0.0
    %567 = vmatprep.subr.mxu0 0.0
    %568 = vmatpush1.xpose.msra.mxu0 0.0
    %569 = vmatprep.subr.mxu0 0.0
    %570 = vmatpush1.xpose.msra.mxu0 0.0
    %571 = vmatprep.subr.mxu0 0.0
    %572 = vmatpush1.xpose.msra.mxu0 0.0
    %573 = vmatprep.subr.mxu0 0.0
    %574 = vmatpush1.xpose.msra.mxu0 0.0
    %575 = vmatprep.subr.mxu0 0.0
    %576 = vmatpush1.xpose.msra.mxu0 0.0
    %577 = vmatprep.subr.mxu0 0.0
    %578 = vmatpush1.xpose.msra.mxu0 0.0
    %579 = vmatprep.subr.mxu0 0.0
    %580 = vmatpush1.xpose.msra.mxu0 0.0
    %581 = vmatprep.subr.mxu0 0.0
    %582 = vmatpush1.xpose.msra.mxu0 0.0
    %583 = vmatprep.subr.mxu0 0.0
    %584 = vmatpush1.xpose.msra.mxu0 0.0
    %585 = vmatprep.subr.mxu0 0.0
    %586 = vmatpush1.xpose.msra.mxu0 0.0
    %587 = vmatprep.subr.mxu0 0.0
    %588 = vmatpush1.xpose.msra.mxu0 0.0
    %589 = vmatprep.subr.mxu0 0.0
    %590 = vmatpush1.xpose.msra.mxu0 0.0
    %591 = vmatprep.subr.mxu0 0.0
    %592 = vmatpush1.xpose.msra.mxu0 0.0
    %593 = vmatprep.subr.mxu0 0.0
    %594 = vmatpush1.xpose.msra.mxu0 0.0
    %595 = vmatprep.subr.mxu0 0.0
    %596 = vmatpush1.xpose.msra.mxu0 0.0
    %597 = vmatprep.subr.mxu0 0.0
    %598 = vmatpush1.xpose.msra.mxu0 0.0
    %599 = vmatprep.subr.mxu0 0.0
    %600 = vmatpush1.xpose.msra.mxu0 0.0
    %601 = vmatprep.subr.mxu0 0.0
    %602 = vmatpush1.xpose.msra.mxu0 0.0
    %603 = vmatprep.subr.mxu0 0.0
    %604 = vmatpush1.xpose.msra.mxu0 0.0
    %605 = vmatprep.mubr.f32.mxu0 0.0
    %606 = vmatmul.mubr.f32.gmra.mrb[0].mxu0 %v506
    %v607 = vpop.f32.mrb[0].mxu0
    %v608 = vadd.f32 0.0, %v607
    %v609 = vpop.f32.mrb[0].mxu0
    %610 = vmatprep.mubr.f32.mxu0 0.0
    %611 = vmatmul.mubr.f32.gmra.mrb[0].mxu0 %v509
    %v612 = vpop.f32.mrb[0].mxu0
    %v613 = vadd.f32 0.0, %v612
    %v614 = vpop.f32.mrb[0].mxu0
    %615 = vmatprep.mubr.f32.mxu0 0.0
    %616 = vmatmul.mubr.f32.gmra.mrb[0].mxu0 %v512
    %v617 = vpop.f32.mrb[0].mxu0
    %v618 = vadd.f32 0.0, %v617
    %v619 = vpop.f32.mrb[0].mxu0
    %620 = vmatprep.mubr.f32.mxu0 0.0
    %621 = vmatmul.mubr.f32.gmra.mrb[0].mxu0 %v515
    %v622 = vpop.f32.mrb[0].mxu0
    %v623 = vadd.f32 0.0, %v622
    %v624 = vpop.f32.mrb[0].mxu0
    %625 = vmatprep.mubr.f32.mxu0 0.0
    %626 = vmatmul.mubr.f32.gmra.mrb[0].mxu0 %v518
    %v627 = vpop.f32.mrb[0].mxu0
    %v628 = vadd.f32 0.0, %v627
    %v629 = vpop.f32.mrb[0].mxu0
    %630 = vmatprep.mubr.f32.mxu0 0.0
    %631 = vmatmul.mubr.f32.gmra.mrb[0].mxu0 %v521
    %v632 = vpop.f32.mrb[0].mxu0
    %v633 = vadd.f32 0.0, %v632
    %v634 = vpop.f32.mrb[0].mxu0
    %635 = vmatprep.mubr.f32.mxu0 0.0
    %636 = vmatmul.mubr.f32.gmra.mrb[0].mxu0 %v524
    %v637 = vpop.f32.mrb[0].mxu0
    %v638 = vadd.f32 0.0, %v637
    %v639 = vpop.f32.mrb[0].mxu0
    %640 = vmatprep.mubr.f32.mxu0 0.0
    %641 = vmatmul.mubr.f32.gmra.mrb[0].mxu0 %v527
    %v642 = vpop.f32.mrb[0].mxu0
    %v643 = vadd.f32 0.0, %v642
    %v644 = vpop.f32.mrb[0].mxu0
    %645 = vdwg.mxu0
    %v646 = vmul.f32 %v608, 0.17677669
    %v647 = vmul.f32 %v613, 0.17677669
    %v648 = vmul.f32 %v618, 0.17677669
    %v649 = vmul.f32 %v623, 0.17677669
    %v650 = vmul.f32 %v628, 0.17677669
    %v651 = vmul.f32 %v633, 0.17677669
    %v652 = vmul.f32 %v638, 0.17677669
    %v653 = vmul.f32 %v643, 0.17677669
    %v655 = vsel %vm172, %v646, 0
    %v658 = vsel %vm172, %v647, 0
    %v661 = vsel %vm172, %v648, 0
    %v664 = vsel %vm172, %v649, 0
    %v667 = vsel %vm172, %v650, 0
    %v670 = vsel %vm172, %v651, 0
    %v673 = vsel %vm172, %v652, 0
    %v676 = vsel %vm172, %v653, 0
    %678 = vmatprep.subr.mxu0 0.0
    %679 = vmatpush1.msra.mxu0 %v369
    %680 = vmatprep.subr.mxu0 0.0
    %681 = vmatpush1.msra.mxu0 %v374
    %682 = vmatprep.subr.mxu0 0.0
    %683 = vmatpush1.msra.mxu0 %v379
    %684 = vmatprep.subr.mxu0 0.0
    %685 = vmatpush1.msra.mxu0 %v384
    %686 = vmatprep.subr.mxu0 0.0
    %687 = vmatpush1.msra.mxu0 0.0
    %688 = vmatprep.subr.mxu0 0.0
    %689 = vmatpush1.msra.mxu0 0.0
    %690 = vmatprep.subr.mxu0 0.0
    %691 = vmatpush1.msra.mxu0 0.0
    %692 = vmatprep.subr.mxu0 0.0
    %693 = vmatpush1.msra.mxu0 0.0
    %694 = vmatprep.subr.mxu0 0.0
    %695 = vmatpush1.msra.mxu0 0.0
    %696 = vmatprep.subr.mxu0 0.0
    %697 = vmatpush1.msra.mxu0 0.0
    %698 = vmatprep.subr.mxu0 0.0
    %699 = vmatpush1.msra.mxu0 0.0
    %700 = vmatprep.subr.mxu0 0.0
    %701 = vmatpush1.msra.mxu0 0.0
    %702 = vmatprep.subr.mxu0 0.0
    %703 = vmatpush1.msra.mxu0 0.0
    %704 = vmatprep.subr.mxu0 0.0
    %705 = vmatpush1.msra.mxu0 0.0
    %706 = vmatprep.subr.mxu0 0.0
    %707 = vmatpush1.msra.mxu0 0.0
    %708 = vmatprep.subr.mxu0 0.0
    %709 = vmatpush1.msra.mxu0 0.0
    %710 = vmatprep.subr.mxu0 0.0
    %711 = vmatpush1.msra.mxu0 0.0
    %712 = vmatprep.subr.mxu0 0.0
    %713 = vmatpush1.msra.mxu0 0.0
    %714 = vmatprep.subr.mxu0 0.0
    %715 = vmatpush1.msra.mxu0 0.0
    %716 = vmatprep.subr.mxu0 0.0
    %717 = vmatpush1.msra.mxu0 0.0
    %718 = vmatprep.subr.mxu0 0.0
    %719 = vmatpush1.msra.mxu0 0.0
    %720 = vmatprep.subr.mxu0 0.0
    %721 = vmatpush1.msra.mxu0 0.0
    %722 = vmatprep.subr.mxu0 0.0
    %723 = vmatpush1.msra.mxu0 0.0
    %724 = vmatprep.subr.mxu0 0.0
    %725 = vmatpush1.msra.mxu0 0.0
    %726 = vmatprep.subr.mxu0 0.0
    %727 = vmatpush1.msra.mxu0 0.0
    %728 = vmatprep.subr.mxu0 0.0
    %729 = vmatpush1.msra.mxu0 0.0
    %730 = vmatprep.subr.mxu0 0.0
    %731 = vmatpush1.msra.mxu0 0.0
    %732 = vmatprep.subr.mxu0 0.0
    %733 = vmatpush1.msra.mxu0 0.0
    %734 = vmatprep.subr.mxu0 0.0
    %735 = vmatpush1.msra.mxu0 0.0
    %736 = vmatprep.subr.mxu0 0.0
    %737 = vmatpush1.msra.mxu0 0.0
    %738 = vmatprep.subr.mxu0 0.0
    %739 = vmatpush1.msra.mxu0 0.0
    %740 = vmatprep.subr.mxu0 0.0
    %741 = vmatpush1.msra.mxu0 0.0
    %742 = vmatprep.mubr.f32.mxu0 0.0
    %743 = vmatmul.mubr.f32.gmra.mrb[0].mxu0 %v655
    %v744 = vpop.f32.mrb[0].mxu0
    %v745 = vadd.f32 0.0, %v744
    %v746 = vpop.f32.mrb[0].mxu0
    %747 = vmatprep.mubr.f32.mxu0 0.0
    %748 = vmatmul.mubr.f32.gmra.mrb[0].mxu0 %v658
    %v749 = vpop.f32.mrb[0].mxu0
    %v750 = vadd.f32 0.0, %v749
    %v751 = vpop.f32.mrb[0].mxu0
    %752 = vmatprep.mubr.f32.mxu0 0.0
    %753 = vmatmul.mubr.f32.gmra.mrb[0].mxu0 %v661
    %v754 = vpop.f32.mrb[0].mxu0
    %v755 = vadd.f32 0.0, %v754
    %v756 = vpop.f32.mrb[0].mxu0
    %757 = vmatprep.mubr.f32.mxu0 0.0
    %758 = vmatmul.mubr.f32.gmra.mrb[0].mxu0 %v664
    %v759 = vpop.f32.mrb[0].mxu0
    %v760 = vadd.f32 0.0, %v759
    %v761 = vpop.f32.mrb[0].mxu0
    %762 = vmatprep.mubr.f32.mxu0 0.0
    %763 = vmatmul.mubr.f32.gmra.mrb[0].mxu0 %v667
    %v764 = vpop.f32.mrb[0].mxu0
    %v765 = vadd.f32 0.0, %v764
    %v766 = vpop.f32.mrb[0].mxu0
    %767 = vmatprep.mubr.f32.mxu0 0.0
    %768 = vmatmul.mubr.f32.gmra.mrb[0].mxu0 %v670
    %v769 = vpop.f32.mrb[0].mxu0
    %v770 = vadd.f32 0.0, %v769
    %v771 = vpop.f32.mrb[0].mxu0
    %772 = vmatprep.mubr.f32.mxu0 0.0
    %773 = vmatmul.mubr.f32.gmra.mrb[0].mxu0 %v673
    %v774 = vpop.f32.mrb[0].mxu0
    %v775 = vadd.f32 0.0, %v774
    %v776 = vpop.f32.mrb[0].mxu0
    %777 = vmatprep.mubr.f32.mxu0 0.0
    %778 = vmatmul.mubr.f32.gmra.mrb[0].mxu0 %v676
    %v779 = vpop.f32.mrb[0].mxu0
    %v780 = vadd.f32 0.0, %v779
    %v781 = vpop.f32.mrb[0].mxu0
    %782 = vdwg.mxu0
    %v783 = vsel %vm504, %v745, -inf
    %784 = vmax.xlane.f32.xlu0 %v783
    %v785 = vpop.xlane.xlu0 %784
    %v786 = vsel %vm504, %v750, -inf
    %787 = vmax.xlane.f32.xlu0 %v786
    %v788 = vpop.xlane.xlu0 %787
    %v789 = vsel %vm504, %v755, -inf
    %790 = vmax.xlane.f32.xlu0 %v789
    %v791 = vpop.xlane.xlu0 %790
    %v792 = vsel %vm504, %v760, -inf
    %793 = vmax.xlane.f32.xlu0 %v792
    %v794 = vpop.xlane.xlu0 %793
    %v795 = vsel %vm504, %v765, -inf
    %796 = vmax.xlane.f32.xlu0 %v795
    %v797 = vpop.xlane.xlu0 %796
    %v798 = vsel %vm504, %v770, -inf
    %799 = vmax.xlane.f32.xlu0 %v798
    %v800 = vpop.xlane.xlu0 %799
    %v801 = vsel %vm504, %v775, -inf
    %802 = vmax.xlane.f32.xlu0 %v801
    %v803 = vpop.xlane.xlu0 %802
    %v804 = vsel %vm504, %v780, -inf
    %805 = vmax.xlane.f32.xlu0 %v804
    %v806 = vpop.xlane.xlu0 %805
    %v807 = vsub.f32 %v745, %v785
    %v808 = vsub.f32 %v750, %v788
    %v809 = vsub.f32 %v755, %v791
    %v810 = vsub.f32 %v760, %v794
    %v811 = vsub.f32 %v765, %v797
    %v812 = vsub.f32 %v770, %v800
    %v813 = vsub.f32 %v775, %v803
    %v814 = vsub.f32 %v780, %v806
    %v815 = vmul.f32 %v807, 1.442695
    %v816 = vpow.pop %v815
    %v817 = vmul.f32 %v808, 1.442695
    %v818 = vpow.pop %v817
    %v819 = vmul.f32 %v809, 1.442695
    %v820 = vpow.pop %v819
    %v821 = vmul.f32 %v810, 1.442695
    %v822 = vpow.pop %v821
    %v823 = vmul.f32 %v811, 1.442695
    %v824 = vpow.pop %v823
    %v825 = vmul.f32 %v812, 1.442695
    %v826 = vpow.pop %v825
    %v827 = vmul.f32 %v813, 1.442695
    %v828 = vpow.pop %v827
    %v829 = vmul.f32 %v814, 1.442695
    %v830 = vpow.pop %v829
    %v831 = vsel %vm504, %v816, 0.0
    %832 = vadd.xlane.f32.xlu0 %v831
    %v833 = vpop.xlane.xlu0 %832
    %v834 = vsel %vm504, %v818, 0.0
    %835 = vadd.xlane.f32.xlu0 %v834
    %v836 = vpop.xlane.xlu0 %835
    %v837 = vsel %vm504, %v820, 0.0
    %838 = vadd.xlane.f32.xlu0 %v837
    %v839 = vpop.xlane.xlu0 %838
    %v840 = vsel %vm504, %v822, 0.0
    %841 = vadd.xlane.f32.xlu0 %v840
    %v842 = vpop.xlane.xlu0 %841
    %v843 = vsel %vm504, %v824, 0.0
    %844 = vadd.xlane.f32.xlu0 %v843
    %v845 = vpop.xlane.xlu0 %844
    %v846 = vsel %vm504, %v826, 0.0
    %847 = vadd.xlane.f32.xlu0 %v846
    %v848 = vpop.xlane.xlu0 %847
    %v849 = vsel %vm504, %v828, 0.0
    %850 = vadd.xlane.f32.xlu0 %v849
    %v851 = vpop.xlane.xlu0 %850
    %v852 = vsel %vm504, %v830, 0.0
    %853 = vadd.xlane.f32.xlu0 %v852
    %v854 = vpop.xlane.xlu0 %853
    %v855 = vrcp.pop %v833
    %v856 = vrcp.pop %v836
    %v857 = vrcp.pop %v839
    %v858 = vrcp.pop %v842
    %v859 = vrcp.pop %v845
    %v860 = vrcp.pop %v848
    %v861 = vrcp.pop %v851
    %v862 = vrcp.pop %v854
    %v863 = vmul.f32 %v816, %v855
    %v864 = vmul.f32 %v818, %v856
    %v865 = vmul.f32 %v820, %v857
    %v866 = vmul.f32 %v822, %v858
    %v867 = vmul.f32 %v824, %v859
    %v868 = vmul.f32 %v826, %v860
    %v869 = vmul.f32 %v828, %v861
    %v870 = vmul.f32 %v830, %v862
    %v872 = vsel %vm504, %v486, 0
    %v875 = vsel %vm504, %v491, 0
    %v878 = vsel %vm504, %v496, 0
    %v881 = vsel %vm504, %v501, 0
    %v884 = vsel %vm504, %v863, 0
    %v887 = vsel %vm504, %v864, 0
    %v890 = vsel %vm504, %v865, 0
    %v893 = vsel %vm504, %v866, 0
    %v896 = vsel %vm504, %v867, 0
    %v899 = vsel %vm504, %v868, 0
    %v902 = vsel %vm504, %v869, 0
    %v905 = vsel %vm504, %v870, 0
    %907 = vmatprep.subr.mxu0 0.0
    %908 = vmatpush1.xpose.msra.mxu0 %v884
    %909 = vmatprep.subr.mxu0 0.0
    %910 = vmatpush1.xpose.msra.mxu0 %v887
    %911 = vmatprep.subr.mxu0 0.0
    %912 = vmatpush1.xpose.msra.mxu0 %v890
    %913 = vmatprep.subr.mxu0 0.0
    %914 = vmatpush1.xpose.msra.mxu0 %v893
    %915 = vmatprep.subr.mxu0 0.0
    %916 = vmatpush1.xpose.msra.mxu0 %v896
    %917 = vmatprep.subr.mxu0 0.0
    %918 = vmatpush1.xpose.msra.mxu0 %v899
    %919 = vmatprep.subr.mxu0 0.0
    %920 = vmatpush1.xpose.msra.mxu0 %v902
    %921 = vmatprep.subr.mxu0 0.0
    %922 = vmatpush1.xpose.msra.mxu0 %v905
    %923 = vmatprep.subr.mxu0 0.0
    %924 = vmatpush1.xpose.msra.mxu0 0.0
    %925 = vmatprep.subr.mxu0 0.0
    %926 = vmatpush1.xpose.msra.mxu0 0.0
    %927 = vmatprep.subr.mxu0 0.0
    %928 = vmatpush1.xpose.msra.mxu0 0.0
    %929 = vmatprep.subr.mxu0 0.0
    %930 = vmatpush1.xpose.msra.mxu0 0.0
    %931 = vmatprep.subr.mxu0 0.0
    %932 = vmatpush1.xpose.msra.mxu0 0.0
    %933 = vmatprep.subr.mxu0 0.0
    %934 = vmatpush1.xpose.msra.mxu0 0.0
    %935 = vmatprep.subr.mxu0 0.0
    %936 = vmatpush1.xpose.msra.mxu0 0.0
    %937 = vmatprep.subr.mxu0 0.0
    %938 = vmatpush1.xpose.msra.mxu0 0.0
    %939 = vmatprep.subr.mxu0 0.0
    %940 = vmatpush1.xpose.msra.mxu0 0.0
    %941 = vmatprep.subr.mxu0 0.0
    %942 = vmatpush1.xpose.msra.mxu0 0.0
    %943 = vmatprep.subr.mxu0 0.0
    %944 = vmatpush1.xpose.msra.mxu0 0.0
    %945 = vmatprep.subr.mxu0 0.0
    %946 = vmatpush1.xpose.msra.mxu0 0.0
    %947 = vmatprep.subr.mxu0 0.0
    %948 = vmatpush1.xpose.msra.mxu0 0.0
    %949 = vmatprep.subr.mxu0 0.0
    %950 = vmatpush1.xpose.msra.mxu0 0.0
    %951 = vmatprep.subr.mxu0 0.0
    %952 = vmatpush1.xpose.msra.mxu0 0.0
    %953 = vmatprep.subr.mxu0 0.0
    %954 = vmatpush1.xpose.msra.mxu0 0.0
    %955 = vmatprep.subr.mxu0 0.0
    %956 = vmatpush1.xpose.msra.mxu0 0.0
    %957 = vmatprep.subr.mxu0 0.0
    %958 = vmatpush1.xpose.msra.mxu0 0.0
    %959 = vmatprep.subr.mxu0 0.0
    %960 = vmatpush1.xpose.msra.mxu0 0.0
    %961 = vmatprep.subr.mxu0 0.0
    %962 = vmatpush1.xpose.msra.mxu0 0.0
    %963 = vmatprep.subr.mxu0 0.0
    %964 = vmatpush1.xpose.msra.mxu0 0.0
    %965 = vmatprep.subr.mxu0 0.0
    %966 = vmatpush1.xpose.msra.mxu0 0.0
    %967 = vmatprep.subr.mxu0 0.0
    %968 = vmatpush1.xpose.msra.mxu0 0.0
    %969 = vmatprep.subr.mxu0 0.0
    %970 = vmatpush1.xpose.msra.mxu0 0.0
    %971 = vmatprep.mubr.f32.mxu0 0.0
    %972 = vmatmul.mubr.f32.gmra.mrb[0].mxu0 %v872
    %v973 = vpop.f32.mrb[0].mxu0
    %v974 = vadd.f32 0.0, %v973
    %v975 = vpop.f32.mrb[0].mxu0
    %976 = vmatprep.mubr.f32.mxu0 0.0
    %977 = vmatmul.mubr.f32.gmra.mrb[0].mxu0 %v875
    %v978 = vpop.f32.mrb[0].mxu0
    %v979 = vadd.f32 0.0, %v978
    %v980 = vpop.f32.mrb[0].mxu0
    %981 = vmatprep.mubr.f32.mxu0 0.0
    %982 = vmatmul.mubr.f32.gmra.mrb[0].mxu0 %v878
    %v983 = vpop.f32.mrb[0].mxu0
    %v984 = vadd.f32 0.0, %v983
    %v985 = vpop.f32.mrb[0].mxu0
    %986 = vmatprep.mubr.f32.mxu0 0.0
    %987 = vmatmul.mubr.f32.gmra.mrb[0].mxu0 %v881
    %v988 = vpop.f32.mrb[0].mxu0
    %v989 = vadd.f32 0.0, %v988
    %v990 = vpop.f32.mrb[0].mxu0
    %991 = vdwg.mxu0
    %993 = vset.pattern.permute.xlu0 0
    %994 = vperm.xlu0 %993, %v105
    %v995 = vpop.permute.xlu0 %994
    %998 = vset.pattern.permute.xlu0 0
    %999 = vperm.xlu0 %998, %v106
    %v1000 = vpop.permute.xlu0 %999
    %1003 = vset.pattern.permute.xlu0 0
    %1004 = vperm.xlu0 %1003, %v107
    %v1005 = vpop.permute.xlu0 %1004
    %1008 = vset.pattern.permute.xlu0 0
    %1009 = vperm.xlu0 %1008, %v108
    %v1010 = vpop.permute.xlu0 %1009
    %v1013 = vsel %vm172, %v89, 0
    %v1016 = vsel %vm172, %v90, 0
    %v1019 = vsel %vm172, %v91, 0
    %v1022 = vsel %vm172, %v92, 0
    %1024 = vmatprep.subr.mxu0 0.0
    %1025 = vmatpush1.msra.mxu0 %v974
    %1026 = vmatprep.subr.mxu0 0.0
    %1027 = vmatpush1.msra.mxu0 %v979
    %1028 = vmatprep.subr.mxu0 0.0
    %1029 = vmatpush1.msra.mxu0 %v984
    %1030 = vmatprep.subr.mxu0 0.0
    %1031 = vmatpush1.msra.mxu0 %v989
    %1032 = vmatprep.subr.mxu0 0.0
    %1033 = vmatpush1.msra.mxu0 0.0
    %1034 = vmatprep.subr.mxu0 0.0
    %1035 = vmatpush1.msra.mxu0 0.0
    %1036 = vmatprep.subr.mxu0 0.0
    %1037 = vmatpush1.msra.mxu0 0.0
    %1038 = vmatprep.subr.mxu0 0.0
    %1039 = vmatpush1.msra.mxu0 0.0
    %1040 = vmatprep.subr.mxu0 0.0
    %1041 = vmatpush1.msra.mxu0 0.0
    %1042 = vmatprep.subr.mxu0 0.0
    %1043 = vmatpush1.msra.mxu0 0.0
    %1044 = vmatprep.subr.mxu0 0.0
    %1045 = vmatpush1.msra.mxu0 0.0
    %1046 = vmatprep.subr.mxu0 0.0
    %1047 = vmatpush1.msra.mxu0 0.0
    %1048 = vmatprep.subr.mxu0 0.0
    %1049 = vmatpush1.msra.mxu0 0.0
    %1050 = vmatprep.subr.mxu0 0.0
    %1051 = vmatpush1.msra.mxu0 0.0
    %1052 = vmatprep.subr.mxu0 0.0
    %1053 = vmatpush1.msra.mxu0 0.0
    %1054 = vmatprep.subr.mxu0 0.0
    %1055 = vmatpush1.msra.mxu0 0.0
    %1056 = vmatprep.subr.mxu0 0.0
    %1057 = vmatpush1.msra.mxu0 0.0
    %1058 = vmatprep.subr.mxu0 0.0
    %1059 = vmatpush1.msra.mxu0 0.0
    %1060 = vmatprep.subr.mxu0 0.0
    %1061 = vmatpush1.msra.mxu0 0.0
    %1062 = vmatprep.subr.mxu0 0.0
    %1063 = vmatpush1.msra.mxu0 0.0
    %1064 = vmatprep.subr.mxu0 0.0
    %1065 = vmatpush1.msra.mxu0 0.0
    %1066 = vmatprep.subr.mxu0 0.0
    %1067 = vmatpush1.msra.mxu0 0.0
    %1068 = vmatprep.subr.mxu0 0.0
    %1069 = vmatpush1.msra.mxu0 0.0
    %1070 = vmatprep.subr.mxu0 0.0
    %1071 = vmatpush1.msra.mxu0 0.0
    %1072 = vmatprep.subr.mxu0 0.0
    %1073 = vmatpush1.msra.mxu0 0.0
    %1074 = vmatprep.subr.mxu0 0.0
    %1075 = vmatpush1.msra.mxu0 0.0
    %1076 = vmatprep.subr.mxu0 0.0
    %1077 = vmatpush1.msra.mxu0 0.0
    %1078 = vmatprep.subr.mxu0 0.0
    %1079 = vmatpush1.msra.mxu0 0.0
    %1080 = vmatprep.subr.mxu0 0.0
    %1081 = vmatpush1.msra.mxu0 0.0
    %1082 = vmatprep.subr.mxu0 0.0
    %1083 = vmatpush1.msra.mxu0 0.0
    %1084 = vmatprep.subr.mxu0 0.0
    %1085 = vmatpush1.msra.mxu0 0.0
    %1086 = vmatprep.subr.mxu0 0.0
    %1087 = vmatpush1.msra.mxu0 0.0
    %1088 = vmatprep.mubr.f32.mxu0 0.0
    %1089 = vmatmul.mubr.f32.gmra.mrb[0].mxu0 %v1013
    %v1090 = vpop.f32.mrb[0].mxu0
    %v1091 = vadd.f32 %v995, %v1090
    %v1092 = vpop.f32.mrb[0].mxu0
    %1093 = vmatprep.mubr.f32.mxu0 0.0
    %1094 = vmatmul.mubr.f32.gmra.mrb[0].mxu0 %v1016
    %v1095 = vpop.f32.mrb[0].mxu0
    %v1096 = vadd.f32 %v1000, %v1095
    %v1097 = vpop.f32.mrb[0].mxu0
    %1098 = vmatprep.mubr.f32.mxu0 0.0
    %1099 = vmatmul.mubr.f32.gmra.mrb[0].mxu0 %v1019
    %v1100 = vpop.f32.mrb[0].mxu0
    %v1101 = vadd.f32 %v1005, %v1100
    %v1102 = vpop.f32.mrb[0].mxu0
    %1103 = vmatprep.mubr.f32.mxu0 0.0
    %1104 = vmatmul.mubr.f32.gmra.mrb[0].mxu0 %v1022
    %v1105 = vpop.f32.mrb[0].mxu0
    %v1106 = vadd.f32 %v1010, %v1105
    %v1107 = vpop.f32.mrb[0].mxu0
    %1108 = vdwg.mxu0
    %v1109 = vadd.f32 %v144, %v1091
    %v1110 = vadd.f32 %v145, %v1096
    %v1111 = vadd.f32 %v146, %v1101
    %v1112 = vadd.f32 %v147, %v1106
    %v1113 = vmul.f32 %v1109, 0.5
    %v1114 = vmul.f32 %v1110, 0.5
    %v1115 = vmul.f32 %v1111, 0.5
    %v1116 = vmul.f32 %v1112, 0.5
    %1117 = vst.msk [vmem:[#allocation8] sm:$0xff] %vm504, %v1113
    %1118 = vst.msk [vmem:[#allocation8 + $0x8] sm:$0xff] %vm504, %v1114
    %1119 = vst.msk [vmem:[#allocation8 + $0x10] sm:$0xff] %vm504, %v1115
    %1120 = vst.msk [vmem:[#allocation8 + $0x18] sm:$0xff] %vm504, %v1116
    %s1121 = scalar_lea.vmem %s0, 32
    %v1122 = vld [vmem:[%s1121] sm:$0xff]
    %v1123 = vld [vmem:[%s1121 + $0x8] sm:$0xff]
    %v1124 = vld [vmem:[%s1121 + $0x10] sm:$0xff]
    %v1125 = vld [vmem:[%s1121 + $0x18] sm:$0xff]
    %s1126 = scalar_lea.vmem %s1, 32
    %v1127 = vld [vmem:[%s1126] sm:$0xff]
    %v1128 = vld [vmem:[%s1126 + $0x8] sm:$0xff]
    %v1129 = vld [vmem:[%s1126 + $0x10] sm:$0xff]
    %v1130 = vld [vmem:[%s1126 + $0x18] sm:$0xff]
    %1131 = vmatprep.subr.mxu0 0.0
    %1132 = vmatpush1.msra.mxu0 %v1127
    %1133 = vmatprep.subr.mxu0 0.0
    %1134 = vmatpush1.msra.mxu0 %v1128
    %1135 = vmatprep.subr.mxu0 0.0
    %1136 = vmatpush1.msra.mxu0 %v1129
    %1137 = vmatprep.subr.mxu0 0.0
    %1138 = vmatpush1.msra.mxu0 %v1130
    %1139 = vmatprep.subr.mxu0 0.0
    %1140 = vmatpush1.msra.mxu0 0.0
    %1141 = vmatprep.subr.mxu0 0.0
    %1142 = vmatpush1.msra.mxu0 0.0
    %1143 = vmatprep.subr.mxu0 0.0
    %1144 = vmatpush1.msra.mxu0 0.0
    %1145 = vmatprep.subr.mxu0 0.0
    %1146 = vmatpush1.msra.mxu0 0.0
    %1147 = vmatprep.subr.mxu0 0.0
    %1148 = vmatpush1.msra.mxu0 0.0
    %1149 = vmatprep.subr.mxu0 0.0
    %1150 = vmatpush1.msra.mxu0 0.0
    %1151 = vmatprep.subr.mxu0 0.0
    %1152 = vmatpush1.msra.mxu0 0.0
    %1153 = vmatprep.subr.mxu0 0.0
    %1154 = vmatpush1.msra.mxu0 0.0
    %1155 = vmatprep.subr.mxu0 0.0
    %1156 = vmatpush1.msra.mxu0 0.0
    %1157 = vmatprep.subr.mxu0 0.0
    %1158 = vmatpush1.msra.mxu0 0.0
    %1159 = vmatprep.subr.mxu0 0.0
    %1160 = vmatpush1.msra.mxu0 0.0
    %1161 = vmatprep.subr.mxu0 0.0
    %1162 = vmatpush1.msra.mxu0 0.0
    %1163 = vmatprep.subr.mxu0 0.0
    %1164 = vmatpush1.msra.mxu0 0.0
    %1165 = vmatprep.subr.mxu0 0.0
    %1166 = vmatpush1.msra.mxu0 0.0
    %1167 = vmatprep.subr.mxu0 0.0
    %1168 = vmatpush1.msra.mxu0 0.0
    %1169 = vmatprep.subr.mxu0 0.0
    %1170 = vmatpush1.msra.mxu0 0.0
    %1171 = vmatprep.subr.mxu0 0.0
    %1172 = vmatpush1.msra.mxu0 0.0
    %1173 = vmatprep.subr.mxu0 0.0
    %1174 = vmatpush1.msra.mxu0 0.0
    %1175 = vmatprep.subr.mxu0 0.0
    %1176 = vmatpush1.msra.mxu0 0.0
    %1177 = vmatprep.subr.mxu0 0.0
    %1178 = vmatpush1.msra.mxu0 0.0
    %1179 = vmatprep.subr.mxu0 0.0
    %1180 = vmatpush1.msra.mxu0 0.0
    %1181 = vmatprep.subr.mxu0 0.0
    %1182 = vmatpush1.msra.mxu0 0.0
    %1183 = vmatprep.subr.mxu0 0.0
    %1184 = vmatpush1.msra.mxu0 0.0
    %1185 = vmatprep.subr.mxu0 0.0
    %1186 = vmatpush1.msra.mxu0 0.0
    %1187 = vmatprep.subr.mxu0 0.0
    %1188 = vmatpush1.msra.mxu0 0.0
    %1189 = vmatprep.subr.mxu0 0.0
    %1190 = vmatpush1.msra.mxu0 0.0
    %1191 = vmatprep.subr.mxu0 0.0
    %1192 = vmatpush1.msra.mxu0 0.0
    %1193 = vmatprep.subr.mxu0 0.0
    %1194 = vmatpush1.msra.mxu0 0.0
    %1195 = vmatprep.mubr.f32.mxu0 0.0
    %1196 = vmatmul.mubr.f32.gmra.mrb[0].mxu0 %v174
    %v1197 = vpop.f32.mrb[0].mxu0
    %v1198 = vadd.f32 %v155, %v1197
    %v1199 = vpop.f32.mrb[0].mxu0
    %1200 = vmatprep.mubr.f32.mxu0 0.0
    %1201 = vmatmul.mubr.f32.gmra.mrb[0].mxu0 %v177
    %v1202 = vpop.f32.mrb[0].mxu0
    %v1203 = vadd.f32 %v160, %v1202
    %v1204 = vpop.f32.mrb[0].mxu0
    %1205 = vmatprep.mubr.f32.mxu0 0.0
    %1206 = vmatmul.mubr.f32.gmra.mrb[0].mxu0 %v180
    %v1207 = vpop.f32.mrb[0].mxu0
    %v1208 = vadd.f32 %v165, %v1207
    %v1209 = vpop.f32.mrb[0].mxu0
    %1210 = vmatprep.mubr.f32.mxu0 0.0
    %1211 = vmatmul.mubr.f32.gmra.mrb[0].mxu0 %v183
    %v1212 = vpop.f32.mrb[0].mxu0
    %v1213 = vadd.f32 %v170, %v1212
    %v1214 = vpop.f32.mrb[0].mxu0
    %1215 = vdwg.mxu0
    %1216 = vmatprep.subr.mxu0 0.0
    %1217 = vmatpush1.msra.mxu0 %v1122
    %1218 = vmatprep.subr.mxu0 0.0
    %1219 = vmatpush1.msra.mxu0 %v1123
    %1220 = vmatprep.subr.mxu0 0.0
    %1221 = vmatpush1.msra.mxu0 %v1124
    %1222 = vmatprep.subr.mxu0 0.0
    %1223 = vmatpush1.msra.mxu0 %v1125
    %1224 = vmatprep.subr.mxu0 0.0
    %1225 = vmatpush1.msra.mxu0 0.0
    %1226 = vmatprep.subr.mxu0 0.0
    %1227 = vmatpush1.msra.mxu0 0.0
    %1228 = vmatprep.subr.mxu0 0.0
    %1229 = vmatpush1.msra.mxu0 0.0
    %1230 = vmatprep.subr.mxu0 0.0
    %1231 = vmatpush1.msra.mxu0 0.0
    %1232 = vmatprep.subr.mxu0 0.0
    %1233 = vmatpush1.msra.mxu0 0.0
    %1234 = vmatprep.subr.mxu0 0.0
    %1235 = vmatpush1.msra.mxu0 0.0
    %1236 = vmatprep.subr.mxu0 0.0
    %1237 = vmatpush1.msra.mxu0 0.0
    %1238 = vmatprep.subr.mxu0 0.0
    %1239 = vmatpush1.msra.mxu0 0.0
    %1240 = vmatprep.subr.mxu0 0.0
    %1241 = vmatpush1.msra.mxu0 0.0
    %1242 = vmatprep.subr.mxu0 0.0
    %1243 = vmatpush1.msra.mxu0 0.0
    %1244 = vmatprep.subr.mxu0 0.0
    %1245 = vmatpush1.msra.mxu0 0.0
    %1246 = vmatprep.subr.mxu0 0.0
    %1247 = vmatpush1.msra.mxu0 0.0
    %1248 = vmatprep.subr.mxu0 0.0
    %1249 = vmatpush1.msra.mxu0 0.0
    %1250 = vmatprep.subr.mxu0 0.0
    %1251 = vmatpush1.msra.mxu0 0.0
    %1252 = vmatprep.subr.mxu0 0.0
    %1253 = vmatpush1.msra.mxu0 0.0
    %1254 = vmatprep.subr.mxu0 0.0
    %1255 = vmatpush1.msra.mxu0 0.0
    %1256 = vmatprep.subr.mxu0 0.0
    %1257 = vmatpush1.msra.mxu0 0.0
    %1258 = vmatprep.subr.mxu0 0.0
    %1259 = vmatpush1.msra.mxu0 0.0
    %1260 = vmatprep.subr.mxu0 0.0
    %1261 = vmatpush1.msra.mxu0 0.0
    %1262 = vmatprep.subr.mxu0 0.0
    %1263 = vmatpush1.msra.mxu0 0.0
    %1264 = vmatprep.subr.mxu0 0.0
    %1265 = vmatpush1.msra.mxu0 0.0
    %1266 = vmatprep.subr.mxu0 0.0
    %1267 = vmatpush1.msra.mxu0 0.0
    %1268 = vmatprep.subr.mxu0 0.0
    %1269 = vmatpush1.msra.mxu0 0.0
    %1270 = vmatprep.subr.mxu0 0.0
    %1271 = vmatpush1.msra.mxu0 0.0
    %1272 = vmatprep.subr.mxu0 0.0
    %1273 = vmatpush1.msra.mxu0 0.0
    %1274 = vmatprep.subr.mxu0 0.0
    %1275 = vmatpush1.msra.mxu0 0.0
    %1276 = vmatprep.subr.mxu0 0.0
    %1277 = vmatpush1.msra.mxu0 0.0
    %1278 = vmatprep.subr.mxu0 0.0
    %1279 = vmatpush1.msra.mxu0 0.0
    %1280 = vmatprep.mubr.f32.mxu0 0.0
    %1281 = vmatmul.mubr.f32.gmra.mrb[0].mxu0 %v291
    %v1282 = vpop.f32.mrb[0].mxu0
    %v1283 = vadd.f32 %v273, %v1282
    %v1284 = vpop.f32.mrb[0].mxu0
    %1285 = vmatprep.mubr.f32.mxu0 0.0
    %1286 = vmatmul.mubr.f32.gmra.mrb[0].mxu0 %v294
    %v1287 = vpop.f32.mrb[0].mxu0
    %v1288 = vadd.f32 %v278, %v1287
    %v1289 = vpop.f32.mrb[0].mxu0
    %1290 = vmatprep.mubr.f32.mxu0 0.0
    %1291 = vmatmul.mubr.f32.gmra.mrb[0].mxu0 %v297
    %v1292 = vpop.f32.mrb[0].mxu0
    %v1293 = vadd.f32 %v283, %v1292
    %v1294 = vpop.f32.mrb[0].mxu0
    %1295 = vmatprep.mubr.f32.mxu0 0.0
    %1296 = vmatmul.mubr.f32.gmra.mrb[0].mxu0 %v300
    %v1297 = vpop.f32.mrb[0].mxu0
    %v1298 = vadd.f32 %v288, %v1297
    %v1299 = vpop.f32.mrb[0].mxu0
    %1300 = vdwg.mxu0
    %1301 = vmatprep.subr.mxu0 0.0
    %1302 = vmatpush1.msra.mxu0 %v1127
    %1303 = vmatprep.subr.mxu0 0.0
    %1304 = vmatpush1.msra.mxu0 %v1128
    %1305 = vmatprep.subr.mxu0 0.0
    %1306 = vmatpush1.msra.mxu0 %v1129
    %1307 = vmatprep.subr.mxu0 0.0
    %1308 = vmatpush1.msra.mxu0 %v1130
    %1309 = vmatprep.subr.mxu0 0.0
    %1310 = vmatpush1.msra.mxu0 0.0
    %1311 = vmatprep.subr.mxu0 0.0
    %1312 = vmatpush1.msra.mxu0 0.0
    %1313 = vmatprep.subr.mxu0 0.0
    %1314 = vmatpush1.msra.mxu0 0.0
    %1315 = vmatprep.subr.mxu0 0.0
    %1316 = vmatpush1.msra.mxu0 0.0
    %1317 = vmatprep.subr.mxu0 0.0
    %1318 = vmatpush1.msra.mxu0 0.0
    %1319 = vmatprep.subr.mxu0 0.0
    %1320 = vmatpush1.msra.mxu0 0.0
    %1321 = vmatprep.subr.mxu0 0.0
    %1322 = vmatpush1.msra.mxu0 0.0
    %1323 = vmatprep.subr.mxu0 0.0
    %1324 = vmatpush1.msra.mxu0 0.0
    %1325 = vmatprep.subr.mxu0 0.0
    %1326 = vmatpush1.msra.mxu0 0.0
    %1327 = vmatprep.subr.mxu0 0.0
    %1328 = vmatpush1.msra.mxu0 0.0
    %1329 = vmatprep.subr.mxu0 0.0
    %1330 = vmatpush1.msra.mxu0 0.0
    %1331 = vmatprep.subr.mxu0 0.0
    %1332 = vmatpush1.msra.mxu0 0.0
    %1333 = vmatprep.subr.mxu0 0.0
    %1334 = vmatpush1.msra.mxu0 0.0
    %1335 = vmatprep.subr.mxu0 0.0
    %1336 = vmatpush1.msra.mxu0 0.0
    %1337 = vmatprep.subr.mxu0 0.0
    %1338 = vmatpush1.msra.mxu0 0.0
    %1339 = vmatprep.subr.mxu0 0.0
    %1340 = vmatpush1.msra.mxu0 0.0
    %1341 = vmatprep.subr.mxu0 0.0
    %1342 = vmatpush1.msra.mxu0 0.0
    %1343 = vmatprep.subr.mxu0 0.0
    %1344 = vmatpush1.msra.mxu0 0.0
    %1345 = vmatprep.subr.mxu0 0.0
    %1346 = vmatpush1.msra.mxu0 0.0
    %1347 = vmatprep.subr.mxu0 0.0
    %1348 = vmatpush1.msra.mxu0 0.0
    %1349 = vmatprep.subr.mxu0 0.0
    %1350 = vmatpush1.msra.mxu0 0.0
    %1351 = vmatprep.subr.mxu0 0.0
    %1352 = vmatpush1.msra.mxu0 0.0
    %1353 = vmatprep.subr.mxu0 0.0
    %1354 = vmatpush1.msra.mxu0 0.0
    %1355 = vmatprep.subr.mxu0 0.0
    %1356 = vmatpush1.msra.mxu0 0.0
    %1357 = vmatprep.subr.mxu0 0.0
    %1358 = vmatpush1.msra.mxu0 0.0
    %1359 = vmatprep.subr.mxu0 0.0
    %1360 = vmatpush1.msra.mxu0 0.0
    %1361 = vmatprep.subr.mxu0 0.0
    %1362 = vmatpush1.msra.mxu0 0.0
    %1363 = vmatprep.subr.mxu0 0.0
    %1364 = vmatpush1.msra.mxu0 0.0
    %1365 = vmatprep.mubr.f32.mxu0 0.0
    %1366 = vmatmul.mubr.f32.gmra.mrb[0].mxu0 %v408
    %v1367 = vpop.f32.mrb[0].mxu0
    %v1368 = vadd.f32 %v390, %v1367
    %v1369 = vpop.f32.mrb[0].mxu0
    %1370 = vmatprep.mubr.f32.mxu0 0.0
    %1371 = vmatmul.mubr.f32.gmra.mrb[0].mxu0 %v411
    %v1372 = vpop.f32.mrb[0].mxu0
    %v1373 = vadd.f32 %v395, %v1372
    %v1374 = vpop.f32.mrb[0].mxu0
    %1375 = vmatprep.mubr.f32.mxu0 0.0
    %1376 = vmatmul.mubr.f32.gmra.mrb[0].mxu0 %v414
    %v1377 = vpop.f32.mrb[0].mxu0
    %v1378 = vadd.f32 %v400, %v1377
    %v1379 = vpop.f32.mrb[0].mxu0
    %1380 = vmatprep.mubr.f32.mxu0 0.0
    %1381 = vmatmul.mubr.f32.gmra.mrb[0].mxu0 %v417
    %v1382 = vpop.f32.mrb[0].mxu0
    %v1383 = vadd.f32 %v405, %v1382
    %v1384 = vpop.f32.mrb[0].mxu0
    %1385 = vdwg.mxu0
    %v1387 = vsel %vm504, %v1198, 0
    %v1390 = vsel %vm504, %v1203, 0
    %v1393 = vsel %vm504, %v1208, 0
    %v1396 = vsel %vm504, %v1213, 0
    %1398 = vmatprep.subr.mxu0 0.0
    %1399 = vmatpush1.xpose.msra.mxu0 %v1387
    %1400 = vmatprep.subr.mxu0 0.0
    %1401 = vmatpush1.xpose.msra.mxu0 %v1390
    %1402 = vmatprep.subr.mxu0 0.0
    %1403 = vmatpush1.xpose.msra.mxu0 %v1393
    %1404 = vmatprep.subr.mxu0 0.0
    %1405 = vmatpush1.xpose.msra.mxu0 %v1396
    %1406 = vmatprep.subr.mxu0 0.0
    %1407 = vmatpush1.xpose.msra.mxu0 0.0
    %1408 = vmatprep.subr.mxu0 0.0
    %1409 = vmatpush1.xpose.msra.mxu0 0.0
    %1410 = vmatprep.subr.mxu0 0.0
    %1411 = vmatpush1.xpose.msra.mxu0 0.0
    %1412 = vmatprep.subr.mxu0 0.0
    %1413 = vmatpush1.xpose.msra.mxu0 0.0
    %1414 = vmatprep.subr.mxu0 0.0
    %1415 = vmatpush1.xpose.msra.mxu0 0.0
    %1416 = vmatprep.subr.mxu0 0.0
    %1417 = vmatpush1.xpose.msra.mxu0 0.0
    %1418 = vmatprep.subr.mxu0 0.0
    %1419 = vmatpush1.xpose.msra.mxu0 0.0
    %1420 = vmatprep.subr.mxu0 0.0
    %1421 = vmatpush1.xpose.msra.mxu0 0.0
    %1422 = vmatprep.subr.mxu0 0.0
    %1423 = vmatpush1.xpose.msra.mxu0 0.0
    %1424 = vmatprep.subr.mxu0 0.0
    %1425 = vmatpush1.xpose.msra.mxu0 0.0
    %1426 = vmatprep.subr.mxu0 0.0
    %1427 = vmatpush1.xpose.msra.mxu0 0.0
    %1428 = vmatprep.subr.mxu0 0.0
    %1429 = vmatpush1.xpose.msra.mxu0 0.0
    %1430 = vmatprep.subr.mxu0 0.0
    %1431 = vmatpush1.xpose.msra.mxu0 0.0
    %1432 = vmatprep.subr.mxu0 0.0
    %1433 = vmatpush1.xpose.msra.mxu0 0.0
    %1434 = vmatprep.subr.mxu0 0.0
    %1435 = vmatpush1.xpose.msra.mxu0 0.0
    %1436 = vmatprep.subr.mxu0 0.0
    %1437 = vmatpush1.xpose.msra.mxu0 0.0
    %1438 = vmatprep.subr.mxu0 0.0
    %1439 = vmatpush1.xpose.msra.mxu0 0.0
    %1440 = vmatprep.subr.mxu0 0.0
    %1441 = vmatpush1.xpose.msra.mxu0 0.0
    %1442 = vmatprep.subr.mxu0 0.0
    %1443 = vmatpush1.xpose.msra.mxu0 0.0
    %1444 = vmatprep.subr.mxu0 0.0
    %1445 = vmatpush1.xpose.msra.mxu0 0.0
    %1446 = vmatprep.subr.mxu0 0.0
    %1447 = vmatpush1.xpose.msra.mxu0 0.0
    %1448 = vmatprep.subr.mxu0 0.0
    %1449 = vmatpush1.xpose.msra.mxu0 0.0
    %1450 = vmatprep.subr.mxu0 0.0
    %1451 = vmatpush1.xpose.msra.mxu0 0.0
    %1452 = vmatprep.subr.mxu0 0.0
    %1453 = vmatpush1.xpose.msra.mxu0 0.0
    %1454 = vmatprep.subr.mxu0 0.0
    %1455 = vmatpush1.xpose.msra.mxu0 0.0
    %1456 = vmatprep.subr.mxu0 0.0
    %1457 = vmatpush1.xpose.msra.mxu0 0.0
    %1458 = vmatprep.subr.mxu0 0.0
    %1459 = vmatpush1.xpose.msra.mxu0 0.0
    %1460 = vmatprep.subr.mxu0 0.0
    %1461 = vmatpush1.xpose.msra.mxu0 0.0
    %1462 = vmatprep.mubr.f32.mxu0 0.0
    %1463 = vmatmul.mubr.f32.gmra.mrb[0].mxu0 %v506
    %v1464 = vpop.f32.mrb[0].mxu0
    %v1465 = vadd.f32 0.0, %v1464
    %v1466 = vpop.f32.mrb[0].mxu0
    %1467 = vmatprep.mubr.f32.mxu0 0.0
    %1468 = vmatmul.mubr.f32.gmra.mrb[0].mxu0 %v509
    %v1469 = vpop.f32.mrb[0].mxu0
    %v1470 = vadd.f32 0.0, %v1469
    %v1471 = vpop.f32.mrb[0].mxu0
    %1472 = vmatprep.mubr.f32.mxu0 0.0
    %1473 = vmatmul.mubr.f32.gmra.mrb[0].mxu0 %v512
    %v1474 = vpop.f32.mrb[0].mxu0
    %v1475 = vadd.f32 0.0, %v1474
    %v1476 = vpop.f32.mrb[0].mxu0
    %1477 = vmatprep.mubr.f32.mxu0 0.0
    %1478 = vmatmul.mubr.f32.gmra.mrb[0].mxu0 %v515
    %v1479 = vpop.f32.mrb[0].mxu0
    %v1480 = vadd.f32 0.0, %v1479
    %v1481 = vpop.f32.mrb[0].mxu0
    %1482 = vmatprep.mubr.f32.mxu0 0.0
    %1483 = vmatmul.mubr.f32.gmra.mrb[0].mxu0 %v518
    %v1484 = vpop.f32.mrb[0].mxu0
    %v1485 = vadd.f32 0.0, %v1484
    %v1486 = vpop.f32.mrb[0].mxu0
    %1487 = vmatprep.mubr.f32.mxu0 0.0
    %1488 = vmatmul.mubr.f32.gmra.mrb[0].mxu0 %v521
    %v1489 = vpop.f32.mrb[0].mxu0
    %v1490 = vadd.f32 0.0, %v1489
    %v1491 = vpop.f32.mrb[0].mxu0
    %1492 = vmatprep.mubr.f32.mxu0 0.0
    %1493 = vmatmul.mubr.f32.gmra.mrb[0].mxu0 %v524
    %v1494 = vpop.f32.mrb[0].mxu0
    %v1495 = vadd.f32 0.0, %v1494
    %v1496 = vpop.f32.mrb[0].mxu0
    %1497 = vmatprep.mubr.f32.mxu0 0.0
    %1498 = vmatmul.mubr.f32.gmra.mrb[0].mxu0 %v527
    %v1499 = vpop.f32.mrb[0].mxu0
    %v1500 = vadd.f32 0.0, %v1499
    %v1501 = vpop.f32.mrb[0].mxu0
    %1502 = vdwg.mxu0
    %v1503 = vmul.f32 %v1465, 0.17677669
    %v1504 = vmul.f32 %v1470, 0.17677669
    %v1505 = vmul.f32 %v1475, 0.17677669
    %v1506 = vmul.f32 %v1480, 0.17677669
    %v1507 = vmul.f32 %v1485, 0.17677669
    %v1508 = vmul.f32 %v1490, 0.17677669
    %v1509 = vmul.f32 %v1495, 0.17677669
    %v1510 = vmul.f32 %v1500, 0.17677669
    %v1512 = vsel %vm172, %v1503, 0
    %v1515 = vsel %vm172, %v1504, 0
    %v1518 = vsel %vm172, %v1505, 0
    %v1521 = vsel %vm172, %v1506, 0
    %v1524 = vsel %vm172, %v1507, 0
    %v1527 = vsel %vm172, %v1508, 0
    %v1530 = vsel %vm172, %v1509, 0
    %v1533 = vsel %vm172, %v1510, 0
    %1535 = vmatprep.subr.mxu0 0.0
    %1536 = vmatpush1.msra.mxu0 %v1283
    %1537 = vmatprep.subr.mxu0 0.0
    %1538 = vmatpush1.msra.mxu0 %v1288
    %1539 = vmatprep.subr.mxu0 0.0
    %1540 = vmatpush1.msra.mxu0 %v1293
    %1541 = vmatprep.subr.mxu0 0.0
    %1542 = vmatpush1.msra.mxu0 %v1298
    %1543 = vmatprep.subr.mxu0 0.0
    %1544 = vmatpush1.msra.mxu0 0.0
    %1545 = vmatprep.subr.mxu0 0.0
    %1546 = vmatpush1.msra.mxu0 0.0
    %1547 = vmatprep.subr.mxu0 0.0
    %1548 = vmatpush1.msra.mxu0 0.0
    %1549 = vmatprep.subr.mxu0 0.0
    %1550 = vmatpush1.msra.mxu0 0.0
    %1551 = vmatprep.subr.mxu0 0.0
    %1552 = vmatpush1.msra.mxu0 0.0
    %1553 = vmatprep.subr.mxu0 0.0
    %1554 = vmatpush1.msra.mxu0 0.0
    %1555 = vmatprep.subr.mxu0 0.0
    %1556 = vmatpush1.msra.mxu0 0.0
    %1557 = vmatprep.subr.mxu0 0.0
    %1558 = vmatpush1.msra.mxu0 0.0
    %1559 = vmatprep.subr.mxu0 0.0
    %1560 = vmatpush1.msra.mxu0 0.0
    %1561 = vmatprep.subr.mxu0 0.0
    %1562 = vmatpush1.msra.mxu0 0.0
    %1563 = vmatprep.subr.mxu0 0.0
    %1564 = vmatpush1.msra.mxu0 0.0
    %1565 = vmatprep.subr.mxu0 0.0
    %1566 = vmatpush1.msra.mxu0 0.0
    %1567 = vmatprep.subr.mxu0 0.0
    %1568 = vmatpush1.msra.mxu0 0.0
    %1569 = vmatprep.subr.mxu0 0.0
    %1570 = vmatpush1.msra.mxu0 0.0
    %1571 = vmatprep.subr.mxu0 0.0
    %1572 = vmatpush1.msra.mxu0 0.0
    %1573 = vmatprep.subr.mxu0 0.0
    %1574 = vmatpush1.msra.mxu0 0.0
    %1575 = vmatprep.subr.mxu0 0.0
    %1576 = vmatpush1.msra.mxu0 0.0
    %1577 = vmatprep.subr.mxu0 0.0
    %1578 = vmatpush1.msra.mxu0 0.0
    %1579 = vmatprep.subr.mxu0 0.0
    %1580 = vmatpush1.msra.mxu0 0.0
    %1581 = vmatprep.subr.mxu0 0.0
    %1582 = vmatpush1.msra.mxu0 0.0
    %1583 = vmatprep.subr.mxu0 0.0
    %1584 = vmatpush1.msra.mxu0 0.0
    %1585 = vmatprep.subr.mxu0 0.0
    %1586 = vmatpush1.msra.mxu0 0.0
    %1587 = vmatprep.subr.mxu0 0.0
    %1588 = vmatpush1.msra.mxu0 0.0
    %1589 = vmatprep.subr.mxu0 0.0
    %1590 = vmatpush1.msra.mxu0 0.0
    %1591 = vmatprep.subr.mxu0 0.0
    %1592 = vmatpush1.msra.mxu0 0.0
    %1593 = vmatprep.subr.mxu0 0.0
    %1594 = vmatpush1.msra.mxu0 0.0
    %1595 = vmatprep.subr.mxu0 0.0
    %1596 = vmatpush1.msra.mxu0 0.0
    %1597 = vmatprep.subr.mxu0 0.0
    %1598 = vmatpush1.msra.mxu0 0.0
    %1599 = vmatprep.mubr.f32.mxu0 0.0
    %1600 = vmatmul.mubr.f32.gmra.mrb[0].mxu0 %v1512
    %v1601 = vpop.f32.mrb[0].mxu0
    %v1602 = vadd.f32 0.0, %v1601
    %v1603 = vpop.f32.mrb[0].mxu0
    %1604 = vmatprep.mubr.f32.mxu0 0.0
    %1605 = vmatmul.mubr.f32.gmra.mrb[0].mxu0 %v1515
    %v1606 = vpop.f32.mrb[0].mxu0
    %v1607 = vadd.f32 0.0, %v1606
    %v1608 = vpop.f32.mrb[0].mxu0
    %1609 = vmatprep.mubr.f32.mxu0 0.0
    %1610 = vmatmul.mubr.f32.gmra.mrb[0].mxu0 %v1518
    %v1611 = vpop.f32.mrb[0].mxu0
    %v1612 = vadd.f32 0.0, %v1611
    %v1613 = vpop.f32.mrb[0].mxu0
    %1614 = vmatprep.mubr.f32.mxu0 0.0
    %1615 = vmatmul.mubr.f32.gmra.mrb[0].mxu0 %v1521
    %v1616 = vpop.f32.mrb[0].mxu0
    %v1617 = vadd.f32 0.0, %v1616
    %v1618 = vpop.f32.mrb[0].mxu0
    %1619 = vmatprep.mubr.f32.mxu0 0.0
    %1620 = vmatmul.mubr.f32.gmra.mrb[0].mxu0 %v1524
    %v1621 = vpop.f32.mrb[0].mxu0
    %v1622 = vadd.f32 0.0, %v1621
    %v1623 = vpop.f32.mrb[0].mxu0
    %1624 = vmatprep.mubr.f32.mxu0 0.0
    %1625 = vmatmul.mubr.f32.gmra.mrb[0].mxu0 %v1527
    %v1626 = vpop.f32.mrb[0].mxu0
    %v1627 = vadd.f32 0.0, %v1626
    %v1628 = vpop.f32.mrb[0].mxu0
    %1629 = vmatprep.mubr.f32.mxu0 0.0
    %1630 = vmatmul.mubr.f32.gmra.mrb[0].mxu0 %v1530
    %v1631 = vpop.f32.mrb[0].mxu0
    %v1632 = vadd.f32 0.0, %v1631
    %v1633 = vpop.f32.mrb[0].mxu0
    %1634 = vmatprep.mubr.f32.mxu0 0.0
    %1635 = vmatmul.mubr.f32.gmra.mrb[0].mxu0 %v1533
    %v1636 = vpop.f32.mrb[0].mxu0
    %v1637 = vadd.f32 0.0, %v1636
    %v1638 = vpop.f32.mrb[0].mxu0
    %1639 = vdwg.mxu0
    %v1640 = vsel %vm504, %v1602, -inf
    %1641 = vmax.xlane.f32.xlu0 %v1640
    %v1642 = vpop.xlane.xlu0 %1641
    %v1643 = vsel %vm504, %v1607, -inf
    %1644 = vmax.xlane.f32.xlu0 %v1643
    %v1645 = vpop.xlane.xlu0 %1644
    %v1646 = vsel %vm504, %v1612, -inf
    %1647 = vmax.xlane.f32.xlu0 %v1646
    %v1648 = vpop.xlane.xlu0 %1647
    %v1649 = vsel %vm504, %v1617, -inf
    %1650 = vmax.xlane.f32.xlu0 %v1649
    %v1651 = vpop.xlane.xlu0 %1650
    %v1652 = vsel %vm504, %v1622, -inf
    %1653 = vmax.xlane.f32.xlu0 %v1652
    %v1654 = vpop.xlane.xlu0 %1653
    %v1655 = vsel %vm504, %v1627, -inf
    %1656 = vmax.xlane.f32.xlu0 %v1655
    %v1657 = vpop.xlane.xlu0 %1656
    %v1658 = vsel %vm504, %v1632, -inf
    %1659 = vmax.xlane.f32.xlu0 %v1658
    %v1660 = vpop.xlane.xlu0 %1659
    %v1661 = vsel %vm504, %v1637, -inf
    %1662 = vmax.xlane.f32.xlu0 %v1661
    %v1663 = vpop.xlane.xlu0 %1662
    %v1664 = vsub.f32 %v1602, %v1642
    %v1665 = vsub.f32 %v1607, %v1645
    %v1666 = vsub.f32 %v1612, %v1648
    %v1667 = vsub.f32 %v1617, %v1651
    %v1668 = vsub.f32 %v1622, %v1654
    %v1669 = vsub.f32 %v1627, %v1657
    %v1670 = vsub.f32 %v1632, %v1660
    %v1671 = vsub.f32 %v1637, %v1663
    %v1672 = vmul.f32 %v1664, 1.442695
    %v1673 = vpow.pop %v1672
    %v1674 = vmul.f32 %v1665, 1.442695
    %v1675 = vpow.pop %v1674
    %v1676 = vmul.f32 %v1666, 1.442695
    %v1677 = vpow.pop %v1676
    %v1678 = vmul.f32 %v1667, 1.442695
    %v1679 = vpow.pop %v1678
    %v1680 = vmul.f32 %v1668, 1.442695
    %v1681 = vpow.pop %v1680
    %v1682 = vmul.f32 %v1669, 1.442695
    %v1683 = vpow.pop %v1682
    %v1684 = vmul.f32 %v1670, 1.442695
    %v1685 = vpow.pop %v1684
    %v1686 = vmul.f32 %v1671, 1.442695
    %v1687 = vpow.pop %v1686
    %v1688 = vsel %vm504, %v1673, 0.0
    %1689 = vadd.xlane.f32.xlu0 %v1688
    %v1690 = vpop.xlane.xlu0 %1689
    %v1691 = vsel %vm504, %v1675, 0.0
    %1692 = vadd.xlane.f32.xlu0 %v1691
    %v1693 = vpop.xlane.xlu0 %1692
    %v1694 = vsel %vm504, %v1677, 0.0
    %1695 = vadd.xlane.f32.xlu0 %v1694
    %v1696 = vpop.xlane.xlu0 %1695
    %v1697 = vsel %vm504, %v1679, 0.0
    %1698 = vadd.xlane.f32.xlu0 %v1697
    %v1699 = vpop.xlane.xlu0 %1698
    %v1700 = vsel %vm504, %v1681, 0.0
    %1701 = vadd.xlane.f32.xlu0 %v1700
    %v1702 = vpop.xlane.xlu0 %1701
    %v1703 = vsel %vm504, %v1683, 0.0
    %1704 = vadd.xlane.f32.xlu0 %v1703
    %v1705 = vpop.xlane.xlu0 %1704
    %v1706 = vsel %vm504, %v1685, 0.0
    %1707 = vadd.xlane.f32.xlu0 %v1706
    %v1708 = vpop.xlane.xlu0 %1707
    %v1709 = vsel %vm504, %v1687, 0.0
    %1710 = vadd.xlane.f32.xlu0 %v1709
    %v1711 = vpop.xlane.xlu0 %1710
    %v1712 = vrcp.pop %v1690
    %v1713 = vrcp.pop %v1693
    %v1714 = vrcp.pop %v1696
    %v1715 = vrcp.pop %v1699
    %v1716 = vrcp.pop %v1702
    %v1717 = vrcp.pop %v1705
    %v1718 = vrcp.pop %v1708
    %v1719 = vrcp.pop %v1711
    %v1720 = vmul.f32 %v1673, %v1712
    %v1721 = vmul.f32 %v1675, %v1713
    %v1722 = vmul.f32 %v1677, %v1714
    %v1723 = vmul.f32 %v1679, %v1715
    %v1724 = vmul.f32 %v1681, %v1716
    %v1725 = vmul.f32 %v1683, %v1717
    %v1726 = vmul.f32 %v1685, %v1718
    %v1727 = vmul.f32 %v1687, %v1719
    %v1729 = vsel %vm504, %v1368, 0
    %v1732 = vsel %vm504, %v1373, 0
    %v1735 = vsel %vm504, %v1378, 0
    %v1738 = vsel %vm504, %v1383, 0
    %v1741 = vsel %vm504, %v1720, 0
    %v1744 = vsel %vm504, %v1721, 0
    %v1747 = vsel %vm504, %v1722, 0
    %v1750 = vsel %vm504, %v1723, 0
    %v1753 = vsel %vm504, %v1724, 0
    %v1756 = vsel %vm504, %v1725, 0
    %v1759 = vsel %vm504, %v1726, 0
    %v1762 = vsel %vm504, %v1727, 0
    %1764 = vmatprep.subr.mxu0 0.0
    %1765 = vmatpush1.xpose.msra.mxu0 %v1741
    %1766 = vmatprep.subr.mxu0 0.0
    %1767 = vmatpush1.xpose.msra.mxu0 %v1744
    %1768 = vmatprep.subr.mxu0 0.0
    %1769 = vmatpush1.xpose.msra.mxu0 %v1747
    %1770 = vmatprep.subr.mxu0 0.0
    %1771 = vmatpush1.xpose.msra.mxu0 %v1750
    %1772 = vmatprep.subr.mxu0 0.0
    %1773 = vmatpush1.xpose.msra.mxu0 %v1753
    %1774 = vmatprep.subr.mxu0 0.0
    %1775 = vmatpush1.xpose.msra.mxu0 %v1756
    %1776 = vmatprep.subr.mxu0 0.0
    %1777 = vmatpush1.xpose.msra.mxu0 %v1759
    %1778 = vmatprep.subr.mxu0 0.0
    %1779 = vmatpush1.xpose.msra.mxu0 %v1762
    %1780 = vmatprep.subr.mxu0 0.0
    %1781 = vmatpush1.xpose.msra.mxu0 0.0
    %1782 = vmatprep.subr.mxu0 0.0
    %1783 = vmatpush1.xpose.msra.mxu0 0.0
    %1784 = vmatprep.subr.mxu0 0.0
    %1785 = vmatpush1.xpose.msra.mxu0 0.0
    %1786 = vmatprep.subr.mxu0 0.0
    %1787 = vmatpush1.xpose.msra.mxu0 0.0
    %1788 = vmatprep.subr.mxu0 0.0
    %1789 = vmatpush1.xpose.msra.mxu0 0.0
    %1790 = vmatprep.subr.mxu0 0.0
    %1791 = vmatpush1.xpose.msra.mxu0 0.0
    %1792 = vmatprep.subr.mxu0 0.0
    %1793 = vmatpush1.xpose.msra.mxu0 0.0
    %1794 = vmatprep.subr.mxu0 0.0
    %1795 = vmatpush1.xpose.msra.mxu0 0.0
    %1796 = vmatprep.subr.mxu0 0.0
    %1797 = vmatpush1.xpose.msra.mxu0 0.0
    %1798 = vmatprep.subr.mxu0 0.0
    %1799 = vmatpush1.xpose.msra.mxu0 0.0
    %1800 = vmatprep.subr.mxu0 0.0
    %1801 = vmatpush1.xpose.msra.mxu0 0.0
    %1802 = vmatprep.subr.mxu0 0.0
    %1803 = vmatpush1.xpose.msra.mxu0 0.0
    %1804 = vmatprep.subr.mxu0 0.0
    %1805 = vmatpush1.xpose.msra.mxu0 0.0
    %1806 = vmatprep.subr.mxu0 0.0
    %1807 = vmatpush1.xpose.msra.mxu0 0.0
    %1808 = vmatprep.subr.mxu0 0.0
    %1809 = vmatpush1.xpose.msra.mxu0 0.0
    %1810 = vmatprep.subr.mxu0 0.0
    %1811 = vmatpush1.xpose.msra.mxu0 0.0
    %1812 = vmatprep.subr.mxu0 0.0
    %1813 = vmatpush1.xpose.msra.mxu0 0.0
    %1814 = vmatprep.subr.mxu0 0.0
    %1815 = vmatpush1.xpose.msra.mxu0 0.0
    %1816 = vmatprep.subr.mxu0 0.0
    %1817 = vmatpush1.xpose.msra.mxu0 0.0
    %1818 = vmatprep.subr.mxu0 0.0
    %1819 = vmatpush1.xpose.msra.mxu0 0.0
    %1820 = vmatprep.subr.mxu0 0.0
    %1821 = vmatpush1.xpose.msra.mxu0 0.0
    %1822 = vmatprep.subr.mxu0 0.0
    %1823 = vmatpush1.xpose.msra.mxu0 0.0
    %1824 = vmatprep.subr.mxu0 0.0
    %1825 = vmatpush1.xpose.msra.mxu0 0.0
    %1826 = vmatprep.subr.mxu0 0.0
    %1827 = vmatpush1.xpose.msra.mxu0 0.0
    %1828 = vmatprep.mubr.f32.mxu0 0.0
    %1829 = vmatmul.mubr.f32.gmra.mrb[0].mxu0 %v1729
    %v1830 = vpop.f32.mrb[0].mxu0
    %v1831 = vadd.f32 0.0, %v1830
    %v1832 = vpop.f32.mrb[0].mxu0
    %1833 = vmatprep.mubr.f32.mxu0 0.0
    %1834 = vmatmul.mubr.f32.gmra.mrb[0].mxu0 %v1732
    %v1835 = vpop.f32.mrb[0].mxu0
    %v1836 = vadd.f32 0.0, %v1835
    %v1837 = vpop.f32.mrb[0].mxu0
    %1838 = vmatprep.mubr.f32.mxu0 0.0
    %1839 = vmatmul.mubr.f32.gmra.mrb[0].mxu0 %v1735
    %v1840 = vpop.f32.mrb[0].mxu0
    %v1841 = vadd.f32 0.0, %v1840
    %v1842 = vpop.f32.mrb[0].mxu0
    %1843 = vmatprep.mubr.f32.mxu0 0.0
    %1844 = vmatmul.mubr.f32.gmra.mrb[0].mxu0 %v1738
    %v1845 = vpop.f32.mrb[0].mxu0
    %v1846 = vadd.f32 0.0, %v1845
    %v1847 = vpop.f32.mrb[0].mxu0
    %1848 = vdwg.mxu0
    %1849 = vmatprep.subr.mxu0 0.0
    %1850 = vmatpush1.msra.mxu0 %v1831
    %1851 = vmatprep.subr.mxu0 0.0
    %1852 = vmatpush1.msra.mxu0 %v1836
    %1853 = vmatprep.subr.mxu0 0.0
    %1854 = vmatpush1.msra.mxu0 %v1841
    %1855 = vmatprep.subr.mxu0 0.0
    %1856 = vmatpush1.msra.mxu0 %v1846
    %1857 = vmatprep.subr.mxu0 0.0
    %1858 = vmatpush1.msra.mxu0 0.0
    %1859 = vmatprep.subr.mxu0 0.0
    %1860 = vmatpush1.msra.mxu0 0.0
    %1861 = vmatprep.subr.mxu0 0.0
    %1862 = vmatpush1.msra.mxu0 0.0
    %1863 = vmatprep.subr.mxu0 0.0
    %1864 = vmatpush1.msra.mxu0 0.0
    %1865 = vmatprep.subr.mxu0 0.0
    %1866 = vmatpush1.msra.mxu0 0.0
    %1867 = vmatprep.subr.mxu0 0.0
    %1868 = vmatpush1.msra.mxu0 0.0
    %1869 = vmatprep.subr.mxu0 0.0
    %1870 = vmatpush1.msra.mxu0 0.0
    %1871 = vmatprep.subr.mxu0 0.0
    %1872 = vmatpush1.msra.mxu0 0.0
    %1873 = vmatprep.subr.mxu0 0.0
    %1874 = vmatpush1.msra.mxu0 0.0
    %1875 = vmatprep.subr.mxu0 0.0
    %1876 = vmatpush1.msra.mxu0 0.0
    %1877 = vmatprep.subr.mxu0 0.0
    %1878 = vmatpush1.msra.mxu0 0.0
    %1879 = vmatprep.subr.mxu0 0.0
    %1880 = vmatpush1.msra.mxu0 0.0
    %1881 = vmatprep.subr.mxu0 0.0
    %1882 = vmatpush1.msra.mxu0 0.0
    %1883 = vmatprep.subr.mxu0 0.0
    %1884 = vmatpush1.msra.mxu0 0.0
    %1885 = vmatprep.subr.mxu0 0.0
    %1886 = vmatpush1.msra.mxu0 0.0
    %1887 = vmatprep.subr.mxu0 0.0
    %1888 = vmatpush1.msra.mxu0 0.0
    %1889 = vmatprep.subr.mxu0 0.0
    %1890 = vmatpush1.msra.mxu0 0.0
    %1891 = vmatprep.subr.mxu0 0.0
    %1892 = vmatpush1.msra.mxu0 0.0
    %1893 = vmatprep.subr.mxu0 0.0
    %1894 = vmatpush1.msra.mxu0 0.0
    %1895 = vmatprep.subr.mxu0 0.0
    %1896 = vmatpush1.msra.mxu0 0.0
    %1897 = vmatprep.subr.mxu0 0.0
    %1898 = vmatpush1.msra.mxu0 0.0
    %1899 = vmatprep.subr.mxu0 0.0
    %1900 = vmatpush1.msra.mxu0 0.0
    %1901 = vmatprep.subr.mxu0 0.0
    %1902 = vmatpush1.msra.mxu0 0.0
    %1903 = vmatprep.subr.mxu0 0.0
    %1904 = vmatpush1.msra.mxu0 0.0
    %1905 = vmatprep.subr.mxu0 0.0
    %1906 = vmatpush1.msra.mxu0 0.0
    %1907 = vmatprep.subr.mxu0 0.0
    %1908 = vmatpush1.msra.mxu0 0.0
    %1909 = vmatprep.subr.mxu0 0.0
    %1910 = vmatpush1.msra.mxu0 0.0
    %1911 = vmatprep.subr.mxu0 0.0
    %1912 = vmatpush1.msra.mxu0 0.0
    %1913 = vmatprep.mubr.f32.mxu0 0.0
    %1914 = vmatmul.mubr.f32.gmra.mrb[0].mxu0 %v1013
    %v1915 = vpop.f32.mrb[0].mxu0
    %v1916 = vadd.f32 %v995, %v1915
    %v1917 = vpop.f32.mrb[0].mxu0
    %1918 = vmatprep.mubr.f32.mxu0 0.0
    %1919 = vmatmul.mubr.f32.gmra.mrb[0].mxu0 %v1016
    %v1920 = vpop.f32.mrb[0].mxu0
    %v1921 = vadd.f32 %v1000, %v1920
    %v1922 = vpop.f32.mrb[0].mxu0
    %1923 = vmatprep.mubr.f32.mxu0 0.0
    %1924 = vmatmul.mubr.f32.gmra.mrb[0].mxu0 %v1019
    %v1925 = vpop.f32.mrb[0].mxu0
    %v1926 = vadd.f32 %v1005, %v1925
    %v1927 = vpop.f32.mrb[0].mxu0
    %1928 = vmatprep.mubr.f32.mxu0 0.0
    %1929 = vmatmul.mubr.f32.gmra.mrb[0].mxu0 %v1022
    %v1930 = vpop.f32.mrb[0].mxu0
    %v1931 = vadd.f32 %v1010, %v1930
    %v1932 = vpop.f32.mrb[0].mxu0
    %1933 = vdwg.mxu0
    %v1934 = vadd.f32 %v1122, %v1916
    %v1935 = vadd.f32 %v1123, %v1921
    %v1936 = vadd.f32 %v1124, %v1926
    %v1937 = vadd.f32 %v1125, %v1931
    %v1938 = vmul.f32 %v1934, 0.5
    %v1939 = vmul.f32 %v1935, 0.5
    %v1940 = vmul.f32 %v1936, 0.5
    %v1941 = vmul.f32 %v1937, 0.5
    %s1942 = scalar_lea.vmem [#allocation8], 32
    %1943 = vst.msk [vmem:[%s1942] sm:$0xff] %vm504, %v1938
    %1944 = vst.msk [vmem:[%s1942 + $0x8] sm:$0xff] %vm504, %v1939
    %1945 = vst.msk [vmem:[%s1942 + $0x10] sm:$0xff] %vm504, %v1940
    %1946 = vst.msk [vmem:[%s1942 + $0x18] sm:$0xff] %vm504, %v1941
    // Predicated region
    $region54: #{tpu_custom_call.1} parent=1 // pred_check
      _
    $region55: #{tpu_custom_call.1} parent=1 // pred_check_branch
      %1948 = sbr.rel (0) target = $region57
    $region56: #{tpu_custom_call.1} parent=1 // pred_region
      %s1950 = ssub.s32 1024, 1024
      %1951 = vsyncadd [#allocation4], %s1950
      %s1952 = sshll.u32 [#allocation8], 4
      %s1953 = int_to_ptr.vmem [resolvable:$true] %s1952
      %1958 = dma.vmem_to_hbm [thread:$0]  %s1953, 1024, %s10, [#allocation4], 128, 128, 8
    $region57: #{tpu_custom_call.1} parent=1 // pred_fallthru
      _
    // Predicated region
    $region58: #{tpu_custom_call.1} parent=1 // pred_check
      _
    $region59: #{tpu_custom_call.1} parent=1 // pred_check_branch
      %1960 = sbr.rel (0) target = $region61
    $region60: #{tpu_custom_call.1} parent=1 // pred_region
      %1961 = dma.done [#allocation4], 1024
    $region61: #{tpu_custom_call.1} parent=1 // pred_fallthru
      _
    %1962 = vsyncpa [#allocation3], 1
    %1963 = vsyncpa [#allocation6], 1
    %1964 = vsyncpa [#allocation4], 1

</llo_original>
